<compile_context>
chip_gen: v7x
topology: tpu7x:2x2x1
jax: 0.10.0
libtpu: 0.0.40
codegen_flags: <defaults>
</compile_context>

<pallas_src>
import functools

import jax
import jax.numpy as jnp
from jax import lax
from jax.experimental import pallas as pl
from jax.experimental.pallas import tpu as pltpu

C = 16  # fixed by the module (Conv2d(16, 16, ...), PReLU(16))
KH = KW = 3


def resblk_kernel(x_ref, w1_ref, b1_ref, alpha_ref, w2_ref, b2_ref, out_ref, *, h):
    # x_ref/out_ref: (M, WC) f32, M = BT*H (BT batch elements stacked on sublanes)
    # w*_ref:        (3, WC, WC) bf16 block-banded conv weights
    # b*_ref, alpha_ref: (1, WC) f32 (per-channel values tiled over W)
    M, WC = out_ref.shape
    x = x_ref[...]                          # f32, kept for the residual add
    x_bf = x.astype(jnp.bfloat16)

    # Row-position masks within each image's h rows (hoisted, computed once).
    row = lax.broadcasted_iota(jnp.int32, (M, WC), 0)
    rmod = row % h
    top = rmod == 0          # first row of each image: dy=0 tap sees zero padding
    bot = rmod == (h - 1)    # last row of each image:  dy=2 tap sees zero padding

    b1 = b1_ref[...]
    b2 = b2_ref[...]
    alpha = alpha_ref[...]

    def conv3x3(inp_bf, w_ref, bias):
        # One MXU matmul per kernel row dy with M = BT*H; the row shift and the
        # zero row-halo are applied afterwards (XLU roll + VPU select).
        p0 = jnp.dot(inp_bf, w_ref[0], preferred_element_type=jnp.float32)
        p1 = jnp.dot(inp_bf, w_ref[1], preferred_element_type=jnp.float32)
        p2 = jnp.dot(inp_bf, w_ref[2], preferred_element_type=jnp.float32)
        # out[r] = p1[r] + p0[r-1] + p2[r+1], zero outside each image.
        p0s = jnp.where(top, 0.0, pltpu.roll(p0, shift=1, axis=0))
        p2s = jnp.where(bot, 0.0, pltpu.roll(p2, shift=M - 1, axis=0))
        return p1 + p0s + p2s + bias

    y = conv3x3(x_bf, w1_ref, b1)
    # PReLU (per-channel alpha, tiled to lanes), f32 elementwise (v5e-safe).
    y = jnp.where(y > 0, y, alpha * y)
    out_ref[...] = conv3x3(y.astype(jnp.bfloat16), w2_ref, b2) + x


def _make_banded(w_hwio, W):
    """(3,3,C,C) HWIO -> (3, W*C, W*C) block-banded matrices.

    BigW[dy][(j+dx-1)*C + ci, j*C + co] = w[dy, dx, ci, co]  (only where
    0 <= j+dx-1 < W; out-of-range taps are absent, reproducing the zero
    column-padding of a SAME conv)."""
    w = w_hwio.astype(jnp.float32)
    bands = []
    for dy in range(KH):
        big = jnp.zeros((W * C, W * C), jnp.float32)
        for dx in range(KW):
            shift = jnp.eye(W, k=1 - dx, dtype=jnp.float32)  # S[j+dx-1, j] = 1
            big = big + jnp.kron(shift, w[dy, dx])
        bands.append(big)
    return jnp.stack(bands, axis=0)  # (3, W*C, W*C)


def resblk_forward(x_nchw, w1, b1, alpha, w2, b2, *, batch_block=None):
    """x_nchw: (B, 16, H, W) float32.  Returns (B, 16, H, W) float32."""
    x = jnp.transpose(x_nchw, (0, 2, 3, 1)).astype(jnp.float32)  # NHWC
    B, H, W, Cin = x.shape
    assert Cin == C
    WC = W * C
    x_f = x.reshape(B * H, WC)  # lane-fused rows, batch stacked on sublanes

    if batch_block is None:
        # Fold as much batch as possible into the matmul M dim while keeping at
        # least two grid steps so ("parallel",) can use both v7x TensorCores.
        batch_block = max(1, B // 2)
    BT = batch_block
    assert B % BT == 0
    M = BT * H

    # bf16 MXU operands (halves weight DMA/VMEM, ~3x MXU throughput); the
    # accumulate stays f32 via preferred_element_type.
    w1b = _make_banded(w1, W).astype(jnp.bfloat16)
    w2b = _make_banded(w2, W).astype(jnp.bfloat16)
    b1r = jnp.tile(b1.astype(jnp.float32), W).reshape(1, WC)
    b2r = jnp.tile(b2.astype(jnp.float32), W).reshape(1, WC)
    ar = jnp.tile(alpha.astype(jnp.float32), W).reshape(1, WC)

    kernel = functools.partial(resblk_kernel, h=H)

    out_f = pl.pallas_call(
        kernel,
        out_shape=jax.ShapeDtypeStruct((B * H, WC), jnp.float32),
        grid=(B // BT,),
        in_specs=[
            pl.BlockSpec((M, WC), lambda b: (b, 0)),
            pl.BlockSpec((KH, WC, WC), lambda b: (0, 0, 0)),
            pl.BlockSpec((1, WC), lambda b: (0, 0)),
            pl.BlockSpec((1, WC), lambda b: (0, 0)),
            pl.BlockSpec((KH, WC, WC), lambda b: (0, 0, 0)),
            pl.BlockSpec((1, WC), lambda b: (0, 0)),
        ],
        out_specs=pl.BlockSpec((M, WC), lambda b: (b, 0)),
        compiler_params=pltpu.CompilerParams(
            dimension_semantics=("parallel",),          # shards batch across TCs
            vmem_limit_bytes=32 * 1024 * 1024),          # headroom (v5e default 16 MiB)
    )(x_f, w1b, b1r, ar, w2b, b2r)

    out = out_f.reshape(B, H, W, C)
    return jnp.transpose(out, (0, 3, 1, 2))  # back to NCHW


def ref_forward_nhwc(x_nhwc, w1, b1, alpha, w2, b2):
    """Pure-JAX reference (NHWC / HWIO convention), all f32."""
    dn = ('NHWC', 'HWIO', 'NHWC')
    y = lax.conv_general_dilated(x_nhwc, w1, (1, 1), 'SAME',
                                 dimension_numbers=dn) + b1
    y = jnp.where(y > 0, y, alpha * y)
    y = lax.conv_general_dilated(y, w2, (1, 1), 'SAME',
                                 dimension_numbers=dn) + b2
    return y + x_nhwc


def init_params(key):
    # Deterministic synthetic init (PyTorch-Conv2d-like uniform bounds), HWIO weights.
    k1, k2, k3, k4 = jax.random.split(key, 4)
    fan_in = C * KH * KW
    bound = 1.0 / jnp.sqrt(fan_in)
    w1 = jax.random.uniform(k1, (KH, KW, C, C), jnp.float32, -bound, bound)
    b1 = jax.random.uniform(k2, (C,), jnp.float32, -bound, bound)
    w2 = jax.random.uniform(k3, (KH, KW, C, C), jnp.float32, -bound, bound)
    b2 = jax.random.uniform(k4, (C,), jnp.float32, -bound, bound)
    alpha = jnp.full((C,), 0.25, jnp.float32)  # nn.PReLU default init
    return w1, b1, alpha, w2, b2


if __name__ == "__main__":
    key = jax.random.PRNGKey(0)
    kx, kp = jax.random.split(key)

    B, H, W = 2, 16, 16
    x_nchw = jax.random.normal(kx, (B, C, H, W), jnp.float32)
    w1, b1, alpha, w2, b2 = init_params(kp)

    out = resblk_forward(x_nchw, w1, b1, alpha, w2, b2)
    out = jax.block_until_ready(out)

    # Correctness check against a pure-JAX f32 reference (tolerance relaxed for
    # the bf16 matmul operands).
    x_nhwc = jnp.transpose(x_nchw, (0, 2, 3, 1))
    ref = ref_forward_nhwc(x_nhwc, w1, b1.reshape(1, 1, 1, C),
                           alpha.reshape(1, 1, 1, C), w2, b2.reshape(1, 1, 1, C))
    ref = jnp.transpose(ref, (0, 3, 1, 2))
    assert out.shape == x_nchw.shape
    assert jnp.allclose(out, ref, atol=5e-2, rtol=5e-2), "mismatch vs reference"

    print("KERNEL_OK")
</pallas_src>

<mosaic_0001>
module attributes {stable_mosaic.version = 11 : i64} {
  func.func @resblk_kernel(%arg0: i32, %arg1: memref<16x256xf32, #tpu.memory_space<vmem>>, %arg2: memref<3x256x256xbf16, #tpu.memory_space<vmem>>, %arg3: memref<1x256xf32, #tpu.memory_space<vmem>>, %arg4: memref<1x256xf32, #tpu.memory_space<vmem>>, %arg5: memref<3x256x256xbf16, #tpu.memory_space<vmem>>, %arg6: memref<1x256xf32, #tpu.memory_space<vmem>>, %arg7: memref<16x256xf32, #tpu.memory_space<vmem>>) attributes {dimension_semantics = [#tpu.dimension_semantics<parallel>], iteration_bounds = array<i64: 2>, scalar_prefetch = 0 : i64, scratch_operands = 0 : i64, tpu.core_type = #tpu.core_type<tc>, window_params = [{transform_indices = @transform_0, window_bounds = array<i64: 16, 256>}, {pipeline_mode = #tpu.pipeline_mode<synchronous>, transform_indices = @transform_1, window_bounds = array<i64: 3, 256, 256>}, {pipeline_mode = #tpu.pipeline_mode<synchronous>, transform_indices = @transform_2, window_bounds = array<i64: 1, 256>}, {pipeline_mode = #tpu.pipeline_mode<synchronous>, transform_indices = @transform_3, window_bounds = array<i64: 1, 256>}, {pipeline_mode = #tpu.pipeline_mode<synchronous>, transform_indices = @transform_4, window_bounds = array<i64: 3, 256, 256>}, {pipeline_mode = #tpu.pipeline_mode<synchronous>, transform_indices = @transform_5, window_bounds = array<i64: 1, 256>}, {transform_indices = @transform_6, window_bounds = array<i64: 16, 256>}]} {
    %c0 = arith.constant 0 : index
    %c0_0 = arith.constant 0 : index
    %0 = vector.load %arg1[%c0, %c0_0] : memref<16x256xf32, #tpu.memory_space<vmem>>, vector<16x256xf32>
    %1 = arith.truncf %0 : vector<16x256xf32> to vector<16x256xbf16>
    %2 = tpu.iota {dimensions = array<i32: 0>} : vector<16x256xi32>
    %c16_i32 = arith.constant 16 : i32
    %c0_i32 = arith.constant 0 : i32
    %3 = arith.cmpi eq, %c16_i32, %c0_i32 : i32
    %c1_i32 = arith.constant 1 : i32
    %4 = arith.select %3, %c1_i32, %c16_i32 : i32
    %5 = vector.broadcast %4 : i32 to vector<16x256xi32>
    %6 = arith.remsi %2, %5 : vector<16x256xi32>
    %c0_i32_1 = arith.constant 0 : i32
    %7 = vector.broadcast %c0_i32_1 : i32 to vector<16x256xi32>
    %8 = arith.cmpi ne, %6, %7 : vector<16x256xi32>
    %c0_i32_2 = arith.constant 0 : i32
    %9 = vector.broadcast %c0_i32_2 : i32 to vector<16x256xi32>
    %10 = arith.cmpi slt, %6, %9 : vector<16x256xi32>
    %c0_i32_3 = arith.constant 0 : i32
    %11 = arith.cmpi slt, %4, %c0_i32_3 : i32
    %12 = vector.broadcast %11 : i1 to vector<16x256xi1>
    %13 = vector.broadcast %12 : vector<16x256xi1> to vector<16x256xi1>
    %14 = arith.xori %10, %13 : vector<16x256xi1>
    %15 = arith.andi %14, %8 : vector<16x256xi1>
    %16 = vector.broadcast %4 : i32 to vector<16x256xi32>
    %17 = arith.addi %6, %16 : vector<16x256xi32>
    %18 = arith.select %15, %17, %6 : vector<16x256xi1>, vector<16x256xi32>
    %c0_i32_4 = arith.constant 0 : i32
    %19 = vector.broadcast %c0_i32_4 : i32 to vector<16x256xi32>
    %20 = arith.cmpi eq, %18, %19 : vector<16x256xi32>
    %c15_i32 = arith.constant 15 : i32
    %21 = vector.broadcast %c15_i32 : i32 to vector<16x256xi32>
    %22 = arith.cmpi eq, %18, %21 : vector<16x256xi32>
    %c0_5 = arith.constant 0 : index
    %c0_6 = arith.constant 0 : index
    %23 = vector.load %arg3[%c0_5, %c0_6] : memref<1x256xf32, #tpu.memory_space<vmem>>, vector<1x256xf32>
    %c0_7 = arith.constant 0 : index
    %c0_8 = arith.constant 0 : index
    %24 = vector.load %arg6[%c0_7, %c0_8] : memref<1x256xf32, #tpu.memory_space<vmem>>, vector<1x256xf32>
    %c0_9 = arith.constant 0 : index
    %c0_10 = arith.constant 0 : index
    %25 = vector.load %arg4[%c0_9, %c0_10] : memref<1x256xf32, #tpu.memory_space<vmem>>, vector<1x256xf32>
    %c0_11 = arith.constant 0 : index
    %c0_12 = arith.constant 0 : index
    %c0_13 = arith.constant 0 : index
    %26 = vector.load %arg2[%c0_11, %c0_12, %c0_13] : memref<3x256x256xbf16, #tpu.memory_space<vmem>>, vector<1x256x256xbf16>
    %27 = vector.shape_cast %26 : vector<1x256x256xbf16> to vector<256x256xbf16>
    %cst = arith.constant dense<0.000000e+00> : vector<16x256xf32>
    %28 = tpu.matmul %1, %27, %cst {dimension_numbers = #tpu.dot_dimension_numbers<[1], [0], [0], [1], [0, 0, 1, 1], [], []>} : vector<16x256xbf16>, vector<256x256xbf16>, vector<16x256xf32> -> vector<16x256xf32>
    %c1 = arith.constant 1 : index
    %c0_14 = arith.constant 0 : index
    %c0_15 = arith.constant 0 : index
    %29 = vector.load %arg2[%c1, %c0_14, %c0_15] : memref<3x256x256xbf16, #tpu.memory_space<vmem>>, vector<1x256x256xbf16>
    %30 = vector.shape_cast %29 : vector<1x256x256xbf16> to vector<256x256xbf16>
    %cst_16 = arith.constant dense<0.000000e+00> : vector<16x256xf32>
    %31 = tpu.matmul %1, %30, %cst_16 {dimension_numbers = #tpu.dot_dimension_numbers<[1], [0], [0], [1], [0, 0, 1, 1], [], []>} : vector<16x256xbf16>, vector<256x256xbf16>, vector<16x256xf32> -> vector<16x256xf32>
    %c2 = arith.constant 2 : index
    %c0_17 = arith.constant 0 : index
    %c0_18 = arith.constant 0 : index
    %32 = vector.load %arg2[%c2, %c0_17, %c0_18] : memref<3x256x256xbf16, #tpu.memory_space<vmem>>, vector<1x256x256xbf16>
    %33 = vector.shape_cast %32 : vector<1x256x256xbf16> to vector<256x256xbf16>
    %cst_19 = arith.constant dense<0.000000e+00> : vector<16x256xf32>
    %34 = tpu.matmul %1, %33, %cst_19 {dimension_numbers = #tpu.dot_dimension_numbers<[1], [0], [0], [1], [0, 0, 1, 1], [], []>} : vector<16x256xbf16>, vector<256x256xbf16>, vector<16x256xf32> -> vector<16x256xf32>
    %c1_i32_20 = arith.constant 1 : i32
    %35 = tpu.dynamic_rotate %28 by %c1_i32_20 dim 0 : vector<16x256xf32>, i32 -> vector<16x256xf32>
    %cst_21 = arith.constant 0.000000e+00 : f32
    %36 = vector.broadcast %cst_21 : f32 to vector<16x256xf32>
    %37 = arith.select %20, %36, %35 : vector<16x256xi1>, vector<16x256xf32>
    %c15_i32_22 = arith.constant 15 : i32
    %38 = tpu.dynamic_rotate %34 by %c15_i32_22 dim 0 : vector<16x256xf32>, i32 -> vector<16x256xf32>
    %cst_23 = arith.constant 0.000000e+00 : f32
    %39 = vector.broadcast %cst_23 : f32 to vector<16x256xf32>
    %40 = arith.select %22, %39, %38 : vector<16x256xi1>, vector<16x256xf32>
    %41 = arith.addf %31, %37 : vector<16x256xf32>
    %42 = arith.addf %41, %40 : vector<16x256xf32>
    %43 = vector.broadcast %23 : vector<1x256xf32> to vector<16x256xf32>
    %44 = arith.addf %42, %43 : vector<16x256xf32>
    %cst_24 = arith.constant 0.000000e+00 : f32
    %45 = vector.broadcast %cst_24 : f32 to vector<16x256xf32>
    %46 = arith.cmpf ogt, %44, %45 : vector<16x256xf32>
    %47 = vector.broadcast %25 : vector<1x256xf32> to vector<16x256xf32>
    %48 = arith.mulf %47, %44 : vector<16x256xf32>
    %49 = arith.select %46, %44, %48 : vector<16x256xi1>, vector<16x256xf32>
    %50 = arith.truncf %49 : vector<16x256xf32> to vector<16x256xbf16>
    %c0_25 = arith.constant 0 : index
    %c0_26 = arith.constant 0 : index
    %c0_27 = arith.constant 0 : index
    %51 = vector.load %arg5[%c0_25, %c0_26, %c0_27] : memref<3x256x256xbf16, #tpu.memory_space<vmem>>, vector<1x256x256xbf16>
    %52 = vector.shape_cast %51 : vector<1x256x256xbf16> to vector<256x256xbf16>
    %cst_28 = arith.constant dense<0.000000e+00> : vector<16x256xf32>
    %53 = tpu.matmul %50, %52, %cst_28 {dimension_numbers = #tpu.dot_dimension_numbers<[1], [0], [0], [1], [0, 0, 1, 1], [], []>} : vector<16x256xbf16>, vector<256x256xbf16>, vector<16x256xf32> -> vector<16x256xf32>
    %c1_29 = arith.constant 1 : index
    %c0_30 = arith.constant 0 : index
    %c0_31 = arith.constant 0 : index
    %54 = vector.load %arg5[%c1_29, %c0_30, %c0_31] : memref<3x256x256xbf16, #tpu.memory_space<vmem>>, vector<1x256x256xbf16>
    %55 = vector.shape_cast %54 : vector<1x256x256xbf16> to vector<256x256xbf16>
    %cst_32 = arith.constant dense<0.000000e+00> : vector<16x256xf32>
    %56 = tpu.matmul %50, %55, %cst_32 {dimension_numbers = #tpu.dot_dimension_numbers<[1], [0], [0], [1], [0, 0, 1, 1], [], []>} : vector<16x256xbf16>, vector<256x256xbf16>, vector<16x256xf32> -> vector<16x256xf32>
    %c2_33 = arith.constant 2 : index
    %c0_34 = arith.constant 0 : index
    %c0_35 = arith.constant 0 : index
    %57 = vector.load %arg5[%c2_33, %c0_34, %c0_35] : memref<3x256x256xbf16, #tpu.memory_space<vmem>>, vector<1x256x256xbf16>
    %58 = vector.shape_cast %57 : vector<1x256x256xbf16> to vector<256x256xbf16>
    %cst_36 = arith.constant dense<0.000000e+00> : vector<16x256xf32>
    %59 = tpu.matmul %50, %58, %cst_36 {dimension_numbers = #tpu.dot_dimension_numbers<[1], [0], [0], [1], [0, 0, 1, 1], [], []>} : vector<16x256xbf16>, vector<256x256xbf16>, vector<16x256xf32> -> vector<16x256xf32>
    %c1_i32_37 = arith.constant 1 : i32
    %60 = tpu.dynamic_rotate %53 by %c1_i32_37 dim 0 : vector<16x256xf32>, i32 -> vector<16x256xf32>
    %cst_38 = arith.constant 0.000000e+00 : f32
    %61 = vector.broadcast %cst_38 : f32 to vector<16x256xf32>
    %62 = arith.select %20, %61, %60 : vector<16x256xi1>, vector<16x256xf32>
    %c15_i32_39 = arith.constant 15 : i32
    %63 = tpu.dynamic_rotate %59 by %c15_i32_39 dim 0 : vector<16x256xf32>, i32 -> vector<16x256xf32>
    %cst_40 = arith.constant 0.000000e+00 : f32
    %64 = vector.broadcast %cst_40 : f32 to vector<16x256xf32>
    %65 = arith.select %22, %64, %63 : vector<16x256xi1>, vector<16x256xf32>
    %66 = arith.addf %56, %62 : vector<16x256xf32>
    %67 = arith.addf %66, %65 : vector<16x256xf32>
    %68 = vector.broadcast %24 : vector<1x256xf32> to vector<16x256xf32>
    %69 = arith.addf %67, %68 : vector<16x256xf32>
    %70 = arith.addf %69, %0 : vector<16x256xf32>
    %c0_41 = arith.constant 0 : index
    %c0_42 = arith.constant 0 : index
    %71 = vector.load %arg7[%c0_41, %c0_42] : memref<16x256xf32, #tpu.memory_space<vmem>>, vector<16x256xf32>
    tpu.vector_store %arg7[%c0_41, %c0_42], %70 {strides = array<i32>} : memref<16x256xf32, #tpu.memory_space<vmem>>, vector<16x256xf32>,
    return
  }
  func.func @transform_0(%arg0: i32) -> (i32, i32) {
    %c0_i32 = arith.constant 0 : i32
    %c0_i32_0 = arith.constant 0 : i32
    return %arg0, %c0_i32 : i32, i32
  }
  func.func @transform_1(%arg0: i32) -> (i32, i32, i32) {
    %c0_i32 = arith.constant 0 : i32
    %c0_i32_0 = arith.constant 0 : i32
    %c0_i32_1 = arith.constant 0 : i32
    %c0_i32_2 = arith.constant 0 : i32
    return %c0_i32, %c0_i32_0, %c0_i32_1 : i32, i32, i32
  }
  func.func @transform_2(%arg0: i32) -> (i32, i32) {
    %c0_i32 = arith.constant 0 : i32
    %c0_i32_0 = arith.constant 0 : i32
    %c0_i32_1 = arith.constant 0 : i32
    return %c0_i32, %c0_i32_0 : i32, i32
  }
  func.func @transform_3(%arg0: i32) -> (i32, i32) {
    %c0_i32 = arith.constant 0 : i32
    %c0_i32_0 = arith.constant 0 : i32
    %c0_i32_1 = arith.constant 0 : i32
    return %c0_i32, %c0_i32_0 : i32, i32
  }
  func.func @transform_4(%arg0: i32) -> (i32, i32, i32) {
    %c0_i32 = arith.constant 0 : i32
    %c0_i32_0 = arith.constant 0 : i32
    %c0_i32_1 = arith.constant 0 : i32
    %c0_i32_2 = arith.constant 0 : i32
    return %c0_i32, %c0_i32_0, %c0_i32_1 : i32, i32, i32
  }
  func.func @transform_5(%arg0: i32) -> (i32, i32) {
    %c0_i32 = arith.constant 0 : i32
    %c0_i32_0 = arith.constant 0 : i32
    %c0_i32_1 = arith.constant 0 : i32
    return %c0_i32, %c0_i32_0 : i32, i32
  }
  func.func @transform_6(%arg0: i32) -> (i32, i32) {
    %c0_i32 = arith.constant 0 : i32
    %c0_i32_0 = arith.constant 0 : i32
    return %arg0, %c0_i32 : i32, i32
  }
}

</mosaic_0001>

<llo_original>
// kernel: tpu_custom_call.1
$region0: #{tpu_custom_call.1}
  #allocation0 [shape = 'u32[]', space=smem, size = 0x4, offset = 0x4, fixed_abs, tag = 'smem constant byte address 0x4 - core index']
  #allocation1 [shape = 'u32[144,128]{1,0:T(1,128)}', space=vmem, size = 0x12000, scoped, tag = 'internal scratch']
  %s0 = inlined_call_operand.hbm [shape: f32[32,256], index: 0, kind: input, shape index: {}]
  %s1 = inlined_call_operand.hbm [shape: bf16[3,256,256], index: 1, kind: input, shape index: {}]
  %s2 = inlined_call_operand.vmem [shape: f32[1,256], index: 2, kind: input, shape index: {}]
  %s3 = inlined_call_operand.vmem [shape: f32[1,256], index: 3, kind: input, shape index: {}]
  %s4 = inlined_call_operand.hbm [shape: bf16[3,256,256], index: 4, kind: input, shape index: {}]
  %s5 = inlined_call_operand.vmem [shape: f32[1,256], index: 5, kind: input, shape index: {}]
  %s6 = inlined_call_operand.hbm [shape: f32[32,256], index: 6, kind: output, shape index: {}]
  %s7 = sld [smem:[#allocation0]]
  $region69: #{tpu_custom_call.1} parent=0
    _
  %s9 = ssub.s32 1, %s7
  %s10 = scalar_select 0, %s9, %s7
  $region1: #{tpu_custom_call.1} parent=0
    #allocation2 [shape = 'u8[32768]{0}', space=vmem, size = 0x8000, scoped, tag = 'input window, operand 0']
    #allocation3 [shape = 's32[2]{0}', space=sflag, size = 0x8, scoped, tag = 'scoped memory for tpu_custom_call.1']
    #allocation4 [shape = 's32[2]{0}', space=sflag, size = 0x8, scoped, tag = 'scoped memory for tpu_custom_call.1']
    #allocation5 [shape = 'u8[393216]{0}', space=vmem, size = 0x60000, scoped, tag = 'input window, operand 1, single buffered']
    #allocation6 [shape = 's32[1]{0}', space=sflag, size = 0x4, scoped, tag = 'scoped memory for tpu_custom_call.1']
    #allocation7 [shape = 'u8[393216]{0}', space=vmem, size = 0x60000, scoped, tag = 'input window, operand 4, single buffered']
    #allocation8 [shape = 'u8[32768]{0}', space=vmem, size = 0x8000, scoped, tag = 'output window, operand 0']
    %11 = vsyncpa [#allocation3], 0
    %s12 = scalar_lea.sflag [#allocation3], 1
    %13 = vsyncpa %s12, 0
    %14 = vsyncpa [#allocation6], 0
    %15 = vsyncpa [#allocation4], 0
    %s16 = scalar_lea.sflag [#allocation4], 1
    %17 = vsyncpa %s16, 0
    loop: start=0, step=1, limit=4
    $region2: #{tpu_custom_call.1} parent=1 // loop_pre_header
      _
    $region3: #{tpu_custom_call.1} parent=1 // loop_header
      %s19 = sphi 0, %s23
      %p20 = scmp.ge.s32.totalorder %s19, 4
      %s29 = sphi 0, %s31
      %s32 = sphi 0, %s29
      %s33 = sphi 0, %s32
      %s49 = sphi 0, %s33
      %s53 = sphi 0, %s53
      %s55 = sphi 0, %s53
      %s56 = sphi 0, %s55
      %s70 = sphi 0, %s56
      %s74 = sphi 0, %s74
      %s76 = sphi 0, %s74
      %s77 = sphi 0, %s76
      %s91 = sphi 0, %s77
      %s95 = sphi 0, %s95
      %s97 = sphi 0, %s95
      %s98 = sphi 0, %s97
      %s112 = sphi 0, %s98
      %s116 = sphi 0, %s116
      %s118 = sphi 0, %s116
      %s119 = sphi 0, %s118
      %s133 = sphi 0, %s119
      %s137 = sphi 0, %s137
      %s139 = sphi 0, %s137
      %s140 = sphi 0, %s139
      %s154 = sphi 0, %s140
      %s160 = sphi 0, %s162
      %s163 = sphi 0, %s160
      %s164 = sphi 0, %s163
      %s180 = sphi 0, %s164
    $region4: #{tpu_custom_call.1} parent=1 // loop_header_branch
      %22 = sbr.rel (%p20) target = $region8
    $region5: #{tpu_custom_call.1} parent=1 // loop_body
      %s24 = ssub.s32 %s19, 1
      %s25 = ssub.s32 %s19, 2
      %s26 = sadd.s32 %s19, 1
      %s27 = ssub.s32 %s19, %s26
      %p28 = scmp.eq.s32.totalorder %s27, 0
      %s30 = sadd.s32 %s29, 1
      %s31 = scalar_select %p28, %s29, %s30
      %p34 = pneg %p28
      %p35 = scmp.eq.s32.totalorder %s19, 1
      %p36 = por %p34, %p35
      %p37 = scmp.ne.s32.totalorder %s29, %s32
      %p38 = scmp.eq.s32.totalorder %s19, 0
      %p39 = por %p37, %p38
      %p40 = scmp.ne.s32.totalorder %s29, %s32
      %p41 = scmp.eq.s32.totalorder %s24, 1
      %p42 = por %p40, %p41
      %p43 = scmp.ne.s32.totalorder %s32, %s33
      %p44 = scmp.eq.s32.totalorder %s24, 0
      %p45 = por %p43, %p44
      %p46 = scmp.ne.s32.totalorder %s32, %s33
      %p47 = scmp.eq.s32.totalorder %s25, 1
      %p48 = por %p46, %p47
      %p50 = scmp.ne.s32.totalorder %s33, %s49
      %p51 = scmp.eq.s32.totalorder %s25, 0
      %p52 = por %p50, %p51
      %s54 = sadd.s32 %s53, 1
      %p57 = scmp.eq.s32.totalorder %s19, 1
      %p58 = scmp.ne.s32.totalorder %s53, %s55
      %p59 = scmp.eq.s32.totalorder %s19, 0
      %p60 = por %p58, %p59
      %p61 = scmp.ne.s32.totalorder %s53, %s55
      %p62 = scmp.eq.s32.totalorder %s24, 1
      %p63 = por %p61, %p62
      %p64 = scmp.ne.s32.totalorder %s55, %s56
      %p65 = scmp.eq.s32.totalorder %s24, 0
      %p66 = por %p64, %p65
      %p67 = scmp.ne.s32.totalorder %s55, %s56
      %p68 = scmp.eq.s32.totalorder %s25, 1
      %p69 = por %p67, %p68
      %p71 = scmp.ne.s32.totalorder %s56, %s70
      %p72 = scmp.eq.s32.totalorder %s25, 0
      %p73 = por %p71, %p72
      %s75 = sadd.s32 %s74, 1
      %p78 = scmp.eq.s32.totalorder %s19, 1
      %p79 = scmp.ne.s32.totalorder %s74, %s76
      %p80 = scmp.eq.s32.totalorder %s19, 0
      %p81 = por %p79, %p80
      %p82 = scmp.ne.s32.totalorder %s74, %s76
      %p83 = scmp.eq.s32.totalorder %s24, 1
      %p84 = por %p82, %p83
      %p85 = scmp.ne.s32.totalorder %s76, %s77
      %p86 = scmp.eq.s32.totalorder %s24, 0
      %p87 = por %p85, %p86
      %p88 = scmp.ne.s32.totalorder %s76, %s77
      %p89 = scmp.eq.s32.totalorder %s25, 1
      %p90 = por %p88, %p89
      %p92 = scmp.ne.s32.totalorder %s77, %s91
      %p93 = scmp.eq.s32.totalorder %s25, 0
      %p94 = por %p92, %p93
      %s96 = sadd.s32 %s95, 1
      %p99 = scmp.eq.s32.totalorder %s19, 1
      %p100 = scmp.ne.s32.totalorder %s95, %s97
      %p101 = scmp.eq.s32.totalorder %s19, 0
      %p102 = por %p100, %p101
      %p103 = scmp.ne.s32.totalorder %s95, %s97
      %p104 = scmp.eq.s32.totalorder %s24, 1
      %p105 = por %p103, %p104
      %p106 = scmp.ne.s32.totalorder %s97, %s98
      %p107 = scmp.eq.s32.totalorder %s24, 0
      %p108 = por %p106, %p107
      %p109 = scmp.ne.s32.totalorder %s97, %s98
      %p110 = scmp.eq.s32.totalorder %s25, 1
      %p111 = por %p109, %p110
      %p113 = scmp.ne.s32.totalorder %s98, %s112
      %p114 = scmp.eq.s32.totalorder %s25, 0
      %p115 = por %p113, %p114
      %s117 = sadd.s32 %s116, 1
      %p120 = scmp.eq.s32.totalorder %s19, 1
      %p121 = scmp.ne.s32.totalorder %s116, %s118
      %p122 = scmp.eq.s32.totalorder %s19, 0
      %p123 = por %p121, %p122
      %p124 = scmp.ne.s32.totalorder %s116, %s118
      %p125 = scmp.eq.s32.totalorder %s24, 1
      %p126 = por %p124, %p125
      %p127 = scmp.ne.s32.totalorder %s118, %s119
      %p128 = scmp.eq.s32.totalorder %s24, 0
      %p129 = por %p127, %p128
      %p130 = scmp.ne.s32.totalorder %s118, %s119
      %p131 = scmp.eq.s32.totalorder %s25, 1
      %p132 = por %p130, %p131
      %p134 = scmp.ne.s32.totalorder %s119, %s133
      %p135 = scmp.eq.s32.totalorder %s25, 0
      %p136 = por %p134, %p135
      %s138 = sadd.s32 %s137, 1
      %p141 = scmp.eq.s32.totalorder %s19, 1
      %p142 = scmp.ne.s32.totalorder %s137, %s139
      %p143 = scmp.eq.s32.totalorder %s19, 0
      %p144 = por %p142, %p143
      %p145 = scmp.ne.s32.totalorder %s137, %s139
      %p146 = scmp.eq.s32.totalorder %s24, 1
      %p147 = por %p145, %p146
      %p148 = scmp.ne.s32.totalorder %s139, %s140
      %p149 = scmp.eq.s32.totalorder %s24, 0
      %p150 = por %p148, %p149
      %p151 = scmp.ne.s32.totalorder %s139, %s140
      %p152 = scmp.eq.s32.totalorder %s25, 1
      %p153 = por %p151, %p152
      %p155 = scmp.ne.s32.totalorder %s140, %s154
      %p156 = scmp.eq.s32.totalorder %s25, 0
      %p157 = por %p155, %p156
      %s158 = ssub.s32 %s19, %s26
      %p159 = scmp.eq.s32.totalorder %s158, 0
      %s161 = sadd.s32 %s160, 1
      %s162 = scalar_select %p159, %s160, %s161
      %p165 = pneg %p159
      %p166 = scmp.eq.s32.totalorder %s19, 1
      %p167 = por %p165, %p166
      %p168 = scmp.ne.s32.totalorder %s160, %s163
      %p169 = scmp.eq.s32.totalorder %s19, 0
      %p170 = por %p168, %p169
      %p171 = scmp.ne.s32.totalorder %s160, %s163
      %p172 = scmp.eq.s32.totalorder %s24, 1
      %p173 = por %p171, %p172
      %p174 = scmp.ne.s32.totalorder %s163, %s164
      %p175 = scmp.eq.s32.totalorder %s24, 0
      %p176 = por %p174, %p175
      %p177 = scmp.ne.s32.totalorder %s163, %s164
      %p178 = scmp.eq.s32.totalorder %s25, 1
      %p179 = por %p177, %p178
      %p181 = scmp.ne.s32.totalorder %s164, %s180
      %p182 = scmp.eq.s32.totalorder %s25, 0
      %p183 = por %p181, %p182
      %p184 = scmp.le.s32.totalorder 1, %s19
      %p185 = scmp.lt.s32.totalorder %s19, 3
      %p186 = pnand %p184, %p185
      %p187 = pneg %p186
      // Predicated region
      $region9: #{tpu_custom_call.1} parent=5 // pred_check
        _
      $region10: #{tpu_custom_call.1} parent=5 // pred_check_branch
        %189 = sbr.rel (%p186) target = $region12
      $region11: #{tpu_custom_call.1} parent=5 // pred_region
        %s190 = ssub.s32 %s19, 1
        // Predicated region
        $region13: #{tpu_custom_call.1} parent=11 // pred_check
          %p191 = pneg %p66
        $region14: #{tpu_custom_call.1} parent=11 // pred_check_branch
          %193 = sbr.rel (%p191) target = $region16
        $region15: #{tpu_custom_call.1} parent=11 // pred_region
          %s195 = ssub.s32 12288, 12288
          %196 = vsyncadd [#allocation6], %s195
          %s197 = sshll.u32 [#allocation5], 4
          %s198 = int_to_ptr.vmem [resolvable:$true] %s197
          %203 = dma.hbm_to_vmem [thread:$0]  %s1, 12288, %s198, [#allocation6], 128, 128, 8
        $region16: #{tpu_custom_call.1} parent=11 // pred_fallthru
          _
        // Predicated region
        $region17: #{tpu_custom_call.1} parent=11 // pred_check
          %p204 = pneg %p87
        $region18: #{tpu_custom_call.1} parent=11 // pred_check_branch
          %206 = sbr.rel (%p204) target = $region20
        $region19: #{tpu_custom_call.1} parent=11 // pred_region
          _
        $region20: #{tpu_custom_call.1} parent=11 // pred_fallthru
          _
        // Predicated region
        $region21: #{tpu_custom_call.1} parent=11 // pred_check
          %p207 = pneg %p108
        $region22: #{tpu_custom_call.1} parent=11 // pred_check_branch
          %209 = sbr.rel (%p207) target = $region24
        $region23: #{tpu_custom_call.1} parent=11 // pred_region
          _
        $region24: #{tpu_custom_call.1} parent=11 // pred_fallthru
          _
        // Predicated region
        $region25: #{tpu_custom_call.1} parent=11 // pred_check
          %p210 = pneg %p129
        $region26: #{tpu_custom_call.1} parent=11 // pred_check_branch
          %212 = sbr.rel (%p210) target = $region28
        $region27: #{tpu_custom_call.1} parent=11 // pred_region
          %s214 = ssub.s32 12288, 12288
          %215 = vsyncadd [#allocation6], %s214
          %s216 = sshll.u32 [#allocation7], 4
          %s217 = int_to_ptr.vmem [resolvable:$true] %s216
          %222 = dma.hbm_to_vmem [thread:$0]  %s4, 12288, %s217, [#allocation6], 128, 128, 8
        $region28: #{tpu_custom_call.1} parent=11 // pred_fallthru
          _
        // Predicated region
        $region29: #{tpu_custom_call.1} parent=11 // pred_check
          %p223 = pneg %p150
        $region30: #{tpu_custom_call.1} parent=11 // pred_check_branch
          %225 = sbr.rel (%p223) target = $region32
        $region31: #{tpu_custom_call.1} parent=11 // pred_region
          _
        $region32: #{tpu_custom_call.1} parent=11 // pred_fallthru
          _
      $region12: #{tpu_custom_call.1} parent=5 // pred_fallthru
        _
      %p226 = scmp.lt.s32.totalorder %s19, 2
      // Predicated region
      $region33: #{tpu_custom_call.1} parent=5 // pred_check
        %p227 = pneg %p226
      $region34: #{tpu_custom_call.1} parent=5 // pred_check_branch
        %229 = sbr.rel (%p227) target = $region36
      $region35: #{tpu_custom_call.1} parent=5 // pred_region
        // Predicated region
        $region37: #{tpu_custom_call.1} parent=35 // pred_check
          %p230 = pneg %p39
        $region38: #{tpu_custom_call.1} parent=35 // pred_check_branch
          %232 = sbr.rel (%p230) target = $region40
        $region39: #{tpu_custom_call.1} parent=35 // pred_region
          %s233 = sand.u32 %s29, 1
          %s234 = scalar_lea.sflag [#allocation3], %s233
          %s235 = sand.u32 %s29, 1
          %s236 = smul.addr %s235, 32
          %s237 = scalar_lea.vmem [#allocation2], %s236
          %s238 = smul.u32 2, %s19
          %s240 = ssub.s32 512, 512
          %241 = vsyncadd %s234, %s240
          %s242 = smul.addr %s238, 2
          %s243 = smul.addr %s242, 128
          %s244 = scalar_lea.hbm %s0, %s243
          %s245 = sshll.u32 %s237, 4
          %s246 = int_to_ptr.vmem [resolvable:$true] %s245
          %251 = dma.hbm_to_vmem [thread:$0]  %s244, 512, %s246, %s234, 256, 256, 16
        $region40: #{tpu_custom_call.1} parent=35 // pred_fallthru
          _
      $region36: #{tpu_custom_call.1} parent=5 // pred_fallthru
        _
      %p252 = scmp.le.s32.totalorder 1, %s19
      %p253 = scmp.lt.s32.totalorder %s19, 3
      %p254 = pnand %p252, %p253
      %p255 = pneg %p254
      // Predicated region
      $region41: #{tpu_custom_call.1} parent=5 // pred_check
        _
      $region42: #{tpu_custom_call.1} parent=5 // pred_check_branch
        %257 = sbr.rel (%p254) target = $region44
      $region43: #{tpu_custom_call.1} parent=5 // pred_region
        %s258 = ssub.s32 %s19, 1
        %s259 = sand.u32 %s32, 1
        %s260 = scalar_lea.sflag [#allocation3], %s259
        %s261 = sand.u32 %s32, 1
        %s262 = smul.addr %s261, 32
        %s263 = scalar_lea.vmem [#allocation2], %s262
        // Predicated region
        $region45: #{tpu_custom_call.1} parent=43 // pred_check
          %p264 = pneg %p45
        $region46: #{tpu_custom_call.1} parent=43 // pred_check_branch
          %266 = sbr.rel (%p264) target = $region48
        $region47: #{tpu_custom_call.1} parent=43 // pred_region
          %267 = dma.done %s260, 512
        $region48: #{tpu_custom_call.1} parent=43 // pred_fallthru
          _
        // Predicated region
        $region49: #{tpu_custom_call.1} parent=43 // pred_check
          %p268 = pneg %p66
        $region50: #{tpu_custom_call.1} parent=43 // pred_check_branch
          %270 = sbr.rel (%p268) target = $region52
        $region51: #{tpu_custom_call.1} parent=43 // pred_region
          %271 = dma.done [#allocation6], 12288
        $region52: #{tpu_custom_call.1} parent=43 // pred_fallthru
          _
        // Predicated region
        $region53: #{tpu_custom_call.1} parent=43 // pred_check
          %p272 = pneg %p129
        $region54: #{tpu_custom_call.1} parent=43 // pred_check_branch
          %274 = sbr.rel (%p272) target = $region56
        $region55: #{tpu_custom_call.1} parent=43 // pred_region
          %275 = dma.done [#allocation6], 12288
        $region56: #{tpu_custom_call.1} parent=43 // pred_fallthru
          _
        %s276 = sand.u32 %s32, 1
        %s277 = scalar_lea.sflag [#allocation3], %s276
        %s278 = sand.u32 %s32, 1
        %s279 = smul.addr %s278, 32
        %s280 = scalar_lea.vmem [#allocation2], %s279
        %p281 = pneg %p45
        %p282 = pneg %p42
        %p283 = pneg %p66
        %p284 = pneg %p63
        %p285 = pneg %p87
        %p286 = pneg %p84
        %p287 = pneg %p108
        %p288 = pneg %p105
        %p289 = pneg %p129
        %p290 = pneg %p126
        %p291 = pneg %p150
        %p292 = pneg %p147
        %p293 = pneg %p176
        %p294 = pneg %p173
        %s295 = sand.u32 %s163, 1
        %s296 = scalar_lea.sflag [#allocation4], %s295
        %s297 = sand.u32 %s163, 1
        %s298 = smul.addr %s297, 32
        %s299 = scalar_lea.vmem [#allocation8], %s298
        %s300 = smul.u32 2, %s24
        %s301 = smul.u32 2, %s24
        %v302 = vld [vmem:[%s263] sm:$0xff]
        %v303 = vld [vmem:[%s263 + $0x8] sm:$0xff]
        %v304 = vld [vmem:[%s263 + $0x10] sm:$0xff]
        %v305 = vld [vmem:[%s263 + $0x18] sm:$0xff]
        %v306 = vpack.c.bf16 %v304, %v302
        %v307 = vpack.c.bf16 %v305, %v303
        %v308 = vlaneseq
        %v309 = vshrl.u32 %v308, 7
        %v310 = vadd.s32 %v309, 8
        %vm311 = vcmp.lt.s32.totalorder %v309, 0
        %v312 = vsub.s32 0, %v309
        %v313 = vsel %vm311, %v312, %v309
        %v314 = vshrl.u32 %v313, 4
        %v315 = vand.u32 %v313, 15
        %v316 = vsub.s32 0, %v315
        %v317 = vsel %vm311, %v316, %v315
        %vm318 = vcmp.lt.s32.totalorder %v310, 0
        %v319 = vsub.s32 0, %v310
        %v320 = vsel %vm318, %v319, %v310
        %v321 = vshrl.u32 %v320, 4
        %v322 = vand.u32 %v320, 15
        %v323 = vsub.s32 0, %v322
        %v324 = vsel %vm318, %v323, %v322
        %vm325 = vcmp.ne.s32.totalorder %v317, 0
        %vm326 = vcmp.ne.s32.totalorder %v324, 0
        %vm327 = vcmp.lt.s32.totalorder %v317, 0
        %vm328 = vcmp.lt.s32.totalorder %v324, 0
        %vm329 = vmand %vm327, %vm325
        %vm330 = vmand %vm328, %vm326
        %v331 = vadd.s32 %v317, 16
        %v332 = vadd.s32 %v324, 16
        %v333 = vsel %vm329, %v331, %v317
        %v334 = vsel %vm330, %v332, %v324
        %vm335 = vcmp.eq.s32.totalorder %v333, 0
        %vm336 = vcmp.eq.s32.totalorder %v334, 0
        %vm337 = vcmp.eq.s32.totalorder %v333, 15
        %vm338 = vcmp.eq.s32.totalorder %v334, 15
        %v339 = vld [vmem:[%s2] sm:$0x3]
        %v340 = vld [vmem:[%s5] sm:$0x3]
        %v341 = vld [vmem:[%s3] sm:$0x3]
        %v342 = vld [vmem:[#allocation5] sm:$0xff]
        %v343 = vld [vmem:[#allocation5 + $0x8] sm:$0xff]
        %v344 = vld [vmem:[#allocation5 + $0x10] sm:$0xff]
        %v345 = vld [vmem:[#allocation5 + $0x18] sm:$0xff]
        %v346 = vld [vmem:[#allocation5 + $0x20] sm:$0xff]
        %v347 = vld [vmem:[#allocation5 + $0x28] sm:$0xff]
        %v348 = vld [vmem:[#allocation5 + $0x30] sm:$0xff]
        %v349 = vld [vmem:[#allocation5 + $0x38] sm:$0xff]
        %v350 = vld [vmem:[#allocation5 + $0x40] sm:$0xff]
        %v351 = vld [vmem:[#allocation5 + $0x48] sm:$0xff]
        %v352 = vld [vmem:[#allocation5 + $0x50] sm:$0xff]
        %v353 = vld [vmem:[#allocation5 + $0x58] sm:$0xff]
        %v354 = vld [vmem:[#allocation5 + $0x60] sm:$0xff]
        %v355 = vld [vmem:[#allocation5 + $0x68] sm:$0xff]
        %v356 = vld [vmem:[#allocation5 + $0x70] sm:$0xff]
        %v357 = vld [vmem:[#allocation5 + $0x78] sm:$0xff]
        %v358 = vld [vmem:[#allocation5 + $0x80] sm:$0xff]
        %v359 = vld [vmem:[#allocation5 + $0x88] sm:$0xff]
        %v360 = vld [vmem:[#allocation5 + $0x90] sm:$0xff]
        %v361 = vld [vmem:[#allocation5 + $0x98] sm:$0xff]
        %v362 = vld [vmem:[#allocation5 + $0xa0] sm:$0xff]
        %v363 = vld [vmem:[#allocation5 + $0xa8] sm:$0xff]
        %v364 = vld [vmem:[#allocation5 + $0xb0] sm:$0xff]
        %v365 = vld [vmem:[#allocation5 + $0xb8] sm:$0xff]
        %v366 = vld [vmem:[#allocation5 + $0xc0] sm:$0xff]
        %v367 = vld [vmem:[#allocation5 + $0xc8] sm:$0xff]
        %v368 = vld [vmem:[#allocation5 + $0xd0] sm:$0xff]
        %v369 = vld [vmem:[#allocation5 + $0xd8] sm:$0xff]
        %v370 = vld [vmem:[#allocation5 + $0xe0] sm:$0xff]
        %v371 = vld [vmem:[#allocation5 + $0xe8] sm:$0xff]
        %v372 = vld [vmem:[#allocation5 + $0xf0] sm:$0xff]
        %v373 = vld [vmem:[#allocation5 + $0xf8] sm:$0xff]
        %v406 = vunpack.c.l.b16 %v342
        %v407 = vunpack.c.h.b16 %v342
        %v408 = vunpack.c.l.b16 %v343
        %v409 = vunpack.c.h.b16 %v343
        %v410 = vunpack.c.l.b16 %v344
        %v411 = vunpack.c.h.b16 %v344
        %v412 = vunpack.c.l.b16 %v345
        %v413 = vunpack.c.h.b16 %v345
        %v414 = vunpack.c.l.b16 %v346
        %v415 = vunpack.c.h.b16 %v346
        %v416 = vunpack.c.l.b16 %v347
        %v417 = vunpack.c.h.b16 %v347
        %v418 = vunpack.c.l.b16 %v348
        %v419 = vunpack.c.h.b16 %v348
        %v420 = vunpack.c.l.b16 %v349
        %v421 = vunpack.c.h.b16 %v349
        %v422 = vunpack.c.l.b16 %v350
        %v423 = vunpack.c.h.b16 %v350
        %v424 = vunpack.c.l.b16 %v351
        %v425 = vunpack.c.h.b16 %v351
        %v426 = vunpack.c.l.b16 %v352
        %v427 = vunpack.c.h.b16 %v352
        %v428 = vunpack.c.l.b16 %v353
        %v429 = vunpack.c.h.b16 %v353
        %v430 = vunpack.c.l.b16 %v354
        %v431 = vunpack.c.h.b16 %v354
        %v432 = vunpack.c.l.b16 %v355
        %v433 = vunpack.c.h.b16 %v355
        %v434 = vunpack.c.l.b16 %v356
        %v435 = vunpack.c.h.b16 %v356
        %v436 = vunpack.c.l.b16 %v357
        %v437 = vunpack.c.h.b16 %v357
        %v438 = vunpack.c.l.b16 %v358
        %v439 = vunpack.c.h.b16 %v358
        %v440 = vunpack.c.l.b16 %v359
        %v441 = vunpack.c.h.b16 %v359
        %v442 = vunpack.c.l.b16 %v360
        %v443 = vunpack.c.h.b16 %v360
        %v444 = vunpack.c.l.b16 %v361
        %v445 = vunpack.c.h.b16 %v361
        %v446 = vunpack.c.l.b16 %v362
        %v447 = vunpack.c.h.b16 %v362
        %v448 = vunpack.c.l.b16 %v363
        %v449 = vunpack.c.h.b16 %v363
        %v450 = vunpack.c.l.b16 %v364
        %v451 = vunpack.c.h.b16 %v364
        %v452 = vunpack.c.l.b16 %v365
        %v453 = vunpack.c.h.b16 %v365
        %v454 = vunpack.c.l.b16 %v366
        %v455 = vunpack.c.h.b16 %v366
        %v456 = vunpack.c.l.b16 %v367
        %v457 = vunpack.c.h.b16 %v367
        %v458 = vunpack.c.l.b16 %v368
        %v459 = vunpack.c.h.b16 %v368
        %v460 = vunpack.c.l.b16 %v369
        %v461 = vunpack.c.h.b16 %v369
        %v462 = vunpack.c.l.b16 %v370
        %v463 = vunpack.c.h.b16 %v370
        %v464 = vunpack.c.l.b16 %v371
        %v465 = vunpack.c.h.b16 %v371
        %v466 = vunpack.c.l.b16 %v372
        %v467 = vunpack.c.h.b16 %v372
        %v468 = vunpack.c.l.b16 %v373
        %v469 = vunpack.c.h.b16 %v373
        %v470 = vpack.c.b16 %v408, %v406
        %v471 = vpack.c.b16 %v409, %v407
        %v472 = vpack.c.b16 %v412, %v410
        %v473 = vpack.c.b16 %v413, %v411
        %v474 = vpack.c.b16 %v416, %v414
        %v475 = vpack.c.b16 %v417, %v415
        %v476 = vpack.c.b16 %v420, %v418
        %v477 = vpack.c.b16 %v421, %v419
        %v478 = vpack.c.b16 %v424, %v422
        %v479 = vpack.c.b16 %v425, %v423
        %v480 = vpack.c.b16 %v428, %v426
        %v481 = vpack.c.b16 %v429, %v427
        %v482 = vpack.c.b16 %v432, %v430
        %v483 = vpack.c.b16 %v433, %v431
        %v484 = vpack.c.b16 %v436, %v434
        %v485 = vpack.c.b16 %v437, %v435
        %v486 = vpack.c.b16 %v440, %v438
        %v487 = vpack.c.b16 %v441, %v439
        %v488 = vpack.c.b16 %v444, %v442
        %v489 = vpack.c.b16 %v445, %v443
        %v490 = vpack.c.b16 %v448, %v446
        %v491 = vpack.c.b16 %v449, %v447
        %v492 = vpack.c.b16 %v452, %v450
        %v493 = vpack.c.b16 %v453, %v451
        %v494 = vpack.c.b16 %v456, %v454
        %v495 = vpack.c.b16 %v457, %v455
        %v496 = vpack.c.b16 %v460, %v458
        %v497 = vpack.c.b16 %v461, %v459
        %v498 = vpack.c.b16 %v464, %v462
        %v499 = vpack.c.b16 %v465, %v463
        %v500 = vpack.c.b16 %v468, %v466
        %v501 = vpack.c.b16 %v469, %v467
        %534 = vmatprep.subr.bf16.mxu0 %v471
        %535 = vmatpush1.bf16.msra.mxu0 %v470
        %536 = vmatprep.subr.bf16.mxu0 %v473
        %537 = vmatpush1.bf16.msra.mxu0 %v472
        %538 = vmatprep.subr.bf16.mxu0 %v475
        %539 = vmatpush1.bf16.msra.mxu0 %v474
        %540 = vmatprep.subr.bf16.mxu0 %v477
        %541 = vmatpush1.bf16.msra.mxu0 %v476
        %542 = vmatprep.subr.bf16.mxu0 %v479
        %543 = vmatpush1.bf16.msra.mxu0 %v478
        %544 = vmatprep.subr.bf16.mxu0 %v481
        %545 = vmatpush1.bf16.msra.mxu0 %v480
        %546 = vmatprep.subr.bf16.mxu0 %v483
        %547 = vmatpush1.bf16.msra.mxu0 %v482
        %548 = vmatprep.subr.bf16.mxu0 %v485
        %549 = vmatpush1.bf16.msra.mxu0 %v484
        %550 = vmatprep.subr.bf16.mxu0 %v487
        %551 = vmatpush1.bf16.msra.mxu0 %v486
        %552 = vmatprep.subr.bf16.mxu0 %v489
        %553 = vmatpush1.bf16.msra.mxu0 %v488
        %554 = vmatprep.subr.bf16.mxu0 %v491
        %555 = vmatpush1.bf16.msra.mxu0 %v490
        %556 = vmatprep.subr.bf16.mxu0 %v493
        %557 = vmatpush1.bf16.msra.mxu0 %v492
        %558 = vmatprep.subr.bf16.mxu0 %v495
        %559 = vmatpush1.bf16.msra.mxu0 %v494
        %560 = vmatprep.subr.bf16.mxu0 %v497
        %561 = vmatpush1.bf16.msra.mxu0 %v496
        %562 = vmatprep.subr.bf16.mxu0 %v499
        %563 = vmatpush1.bf16.msra.mxu0 %v498
        %564 = vmatprep.subr.bf16.mxu0 %v501
        %565 = vmatpush1.bf16.msra.mxu0 %v500
        %566 = vmatprep.mubr.bf16.mxu0 %v307
        %567 = vmatmul.mubr.bf16.gmra.mrb[0].mxu0 %v306
        %v568 = vpop.f32.mrb[0].mxu0
        %v569 = vadd.f32 0.0, %v568
        %v570 = vpop.f32.mrb[0].mxu0
        %v571 = vadd.f32 0.0, %v570
        %v572 = vpop.f32.mrb[0].mxu0
        %v573 = vadd.f32 0.0, %v572
        %v574 = vpop.f32.mrb[0].mxu0
        %v575 = vadd.f32 0.0, %v574
        %576 = vdwg.mxu0
        %s577 = scalar_lea.vmem [#allocation5], 256
        %v578 = vld [vmem:[%s577] sm:$0xff]
        %v579 = vld [vmem:[%s577 + $0x8] sm:$0xff]
        %v580 = vld [vmem:[%s577 + $0x10] sm:$0xff]
        %v581 = vld [vmem:[%s577 + $0x18] sm:$0xff]
        %v582 = vld [vmem:[%s577 + $0x20] sm:$0xff]
        %v583 = vld [vmem:[%s577 + $0x28] sm:$0xff]
        %v584 = vld [vmem:[%s577 + $0x30] sm:$0xff]
        %v585 = vld [vmem:[%s577 + $0x38] sm:$0xff]
        %v586 = vld [vmem:[%s577 + $0x40] sm:$0xff]
        %v587 = vld [vmem:[%s577 + $0x48] sm:$0xff]
        %v588 = vld [vmem:[%s577 + $0x50] sm:$0xff]
        %v589 = vld [vmem:[%s577 + $0x58] sm:$0xff]
        %v590 = vld [vmem:[%s577 + $0x60] sm:$0xff]
        %v591 = vld [vmem:[%s577 + $0x68] sm:$0xff]
        %v592 = vld [vmem:[%s577 + $0x70] sm:$0xff]
        %v593 = vld [vmem:[%s577 + $0x78] sm:$0xff]
        %v594 = vld [vmem:[%s577 + $0x80] sm:$0xff]
        %v595 = vld [vmem:[%s577 + $0x88] sm:$0xff]
        %v596 = vld [vmem:[%s577 + $0x90] sm:$0xff]
        %v597 = vld [vmem:[%s577 + $0x98] sm:$0xff]
        %v598 = vld [vmem:[%s577 + $0xa0] sm:$0xff]
        %v599 = vld [vmem:[%s577 + $0xa8] sm:$0xff]
        %v600 = vld [vmem:[%s577 + $0xb0] sm:$0xff]
        %v601 = vld [vmem:[%s577 + $0xb8] sm:$0xff]
        %v602 = vld [vmem:[%s577 + $0xc0] sm:$0xff]
        %v603 = vld [vmem:[%s577 + $0xc8] sm:$0xff]
        %v604 = vld [vmem:[%s577 + $0xd0] sm:$0xff]
        %v605 = vld [vmem:[%s577 + $0xd8] sm:$0xff]
        %v606 = vld [vmem:[%s577 + $0xe0] sm:$0xff]
        %v607 = vld [vmem:[%s577 + $0xe8] sm:$0xff]
        %v608 = vld [vmem:[%s577 + $0xf0] sm:$0xff]
        %v609 = vld [vmem:[%s577 + $0xf8] sm:$0xff]
        %s610 = scalar_lea.vmem [#allocation5], 512
        %v611 = vld [vmem:[%s610] sm:$0xff]
        %v612 = vld [vmem:[%s610 + $0x8] sm:$0xff]
        %v613 = vld [vmem:[%s610 + $0x10] sm:$0xff]
        %v614 = vld [vmem:[%s610 + $0x18] sm:$0xff]
        %v615 = vld [vmem:[%s610 + $0x20] sm:$0xff]
        %v616 = vld [vmem:[%s610 + $0x28] sm:$0xff]
        %v617 = vld [vmem:[%s610 + $0x30] sm:$0xff]
        %v618 = vld [vmem:[%s610 + $0x38] sm:$0xff]
        %v619 = vld [vmem:[%s610 + $0x40] sm:$0xff]
        %v620 = vld [vmem:[%s610 + $0x48] sm:$0xff]
        %v621 = vld [vmem:[%s610 + $0x50] sm:$0xff]
        %v622 = vld [vmem:[%s610 + $0x58] sm:$0xff]
        %v623 = vld [vmem:[%s610 + $0x60] sm:$0xff]
        %v624 = vld [vmem:[%s610 + $0x68] sm:$0xff]
        %v625 = vld [vmem:[%s610 + $0x70] sm:$0xff]
        %v626 = vld [vmem:[%s610 + $0x78] sm:$0xff]
        %v627 = vld [vmem:[%s610 + $0x80] sm:$0xff]
        %v628 = vld [vmem:[%s610 + $0x88] sm:$0xff]
        %v629 = vld [vmem:[%s610 + $0x90] sm:$0xff]
        %v630 = vld [vmem:[%s610 + $0x98] sm:$0xff]
        %v631 = vld [vmem:[%s610 + $0xa0] sm:$0xff]
        %v632 = vld [vmem:[%s610 + $0xa8] sm:$0xff]
        %v633 = vld [vmem:[%s610 + $0xb0] sm:$0xff]
        %v634 = vld [vmem:[%s610 + $0xb8] sm:$0xff]
        %v635 = vld [vmem:[%s610 + $0xc0] sm:$0xff]
        %v636 = vld [vmem:[%s610 + $0xc8] sm:$0xff]
        %v637 = vld [vmem:[%s610 + $0xd0] sm:$0xff]
        %v638 = vld [vmem:[%s610 + $0xd8] sm:$0xff]
        %v639 = vld [vmem:[%s610 + $0xe0] sm:$0xff]
        %v640 = vld [vmem:[%s610 + $0xe8] sm:$0xff]
        %v641 = vld [vmem:[%s610 + $0xf0] sm:$0xff]
        %v642 = vld [vmem:[%s610 + $0xf8] sm:$0xff]
        %v675 = vunpack.c.l.b16 %v611
        %v676 = vunpack.c.h.b16 %v611
        %v677 = vunpack.c.l.b16 %v612
        %v678 = vunpack.c.h.b16 %v612
        %v679 = vunpack.c.l.b16 %v613
        %v680 = vunpack.c.h.b16 %v613
        %v681 = vunpack.c.l.b16 %v614
        %v682 = vunpack.c.h.b16 %v614
        %v683 = vunpack.c.l.b16 %v615
        %v684 = vunpack.c.h.b16 %v615
        %v685 = vunpack.c.l.b16 %v616
        %v686 = vunpack.c.h.b16 %v616
        %v687 = vunpack.c.l.b16 %v617
        %v688 = vunpack.c.h.b16 %v617
        %v689 = vunpack.c.l.b16 %v618
        %v690 = vunpack.c.h.b16 %v618
        %v691 = vunpack.c.l.b16 %v619
        %v692 = vunpack.c.h.b16 %v619
        %v693 = vunpack.c.l.b16 %v620
        %v694 = vunpack.c.h.b16 %v620
        %v695 = vunpack.c.l.b16 %v621
        %v696 = vunpack.c.h.b16 %v621
        %v697 = vunpack.c.l.b16 %v622
        %v698 = vunpack.c.h.b16 %v622
        %v699 = vunpack.c.l.b16 %v623
        %v700 = vunpack.c.h.b16 %v623
        %v701 = vunpack.c.l.b16 %v624
        %v702 = vunpack.c.h.b16 %v624
        %v703 = vunpack.c.l.b16 %v625
        %v704 = vunpack.c.h.b16 %v625
        %v705 = vunpack.c.l.b16 %v626
        %v706 = vunpack.c.h.b16 %v626
        %v707 = vunpack.c.l.b16 %v627
        %v708 = vunpack.c.h.b16 %v627
        %v709 = vunpack.c.l.b16 %v628
        %v710 = vunpack.c.h.b16 %v628
        %v711 = vunpack.c.l.b16 %v629
        %v712 = vunpack.c.h.b16 %v629
        %v713 = vunpack.c.l.b16 %v630
        %v714 = vunpack.c.h.b16 %v630
        %v715 = vunpack.c.l.b16 %v631
        %v716 = vunpack.c.h.b16 %v631
        %v717 = vunpack.c.l.b16 %v632
        %v718 = vunpack.c.h.b16 %v632
        %v719 = vunpack.c.l.b16 %v633
        %v720 = vunpack.c.h.b16 %v633
        %v721 = vunpack.c.l.b16 %v634
        %v722 = vunpack.c.h.b16 %v634
        %v723 = vunpack.c.l.b16 %v635
        %v724 = vunpack.c.h.b16 %v635
        %v725 = vunpack.c.l.b16 %v636
        %v726 = vunpack.c.h.b16 %v636
        %v727 = vunpack.c.l.b16 %v637
        %v728 = vunpack.c.h.b16 %v637
        %v729 = vunpack.c.l.b16 %v638
        %v730 = vunpack.c.h.b16 %v638
        %v731 = vunpack.c.l.b16 %v639
        %v732 = vunpack.c.h.b16 %v639
        %v733 = vunpack.c.l.b16 %v640
        %v734 = vunpack.c.h.b16 %v640
        %v735 = vunpack.c.l.b16 %v641
        %v736 = vunpack.c.h.b16 %v641
        %v737 = vunpack.c.l.b16 %v642
        %v738 = vunpack.c.h.b16 %v642
        %v739 = vpack.c.b16 %v677, %v675
        %v740 = vpack.c.b16 %v678, %v676
        %v741 = vpack.c.b16 %v681, %v679
        %v742 = vpack.c.b16 %v682, %v680
        %v743 = vpack.c.b16 %v685, %v683
        %v744 = vpack.c.b16 %v686, %v684
        %v745 = vpack.c.b16 %v689, %v687
        %v746 = vpack.c.b16 %v690, %v688
        %v747 = vpack.c.b16 %v693, %v691
        %v748 = vpack.c.b16 %v694, %v692
        %v749 = vpack.c.b16 %v697, %v695
        %v750 = vpack.c.b16 %v698, %v696
        %v751 = vpack.c.b16 %v701, %v699
        %v752 = vpack.c.b16 %v702, %v700
        %v753 = vpack.c.b16 %v705, %v703
        %v754 = vpack.c.b16 %v706, %v704
        %v755 = vpack.c.b16 %v709, %v707
        %v756 = vpack.c.b16 %v710, %v708
        %v757 = vpack.c.b16 %v713, %v711
        %v758 = vpack.c.b16 %v714, %v712
        %v759 = vpack.c.b16 %v717, %v715
        %v760 = vpack.c.b16 %v718, %v716
        %v761 = vpack.c.b16 %v721, %v719
        %v762 = vpack.c.b16 %v722, %v720
        %v763 = vpack.c.b16 %v725, %v723
        %v764 = vpack.c.b16 %v726, %v724
        %v765 = vpack.c.b16 %v729, %v727
        %v766 = vpack.c.b16 %v730, %v728
        %v767 = vpack.c.b16 %v733, %v731
        %v768 = vpack.c.b16 %v734, %v732
        %v769 = vpack.c.b16 %v737, %v735
        %v770 = vpack.c.b16 %v738, %v736
        %803 = vmatprep.subr.bf16.mxu0 %v740
        %804 = vmatpush1.bf16.msra.mxu0 %v739
        %805 = vmatprep.subr.bf16.mxu0 %v742
        %806 = vmatpush1.bf16.msra.mxu0 %v741
        %807 = vmatprep.subr.bf16.mxu0 %v744
        %808 = vmatpush1.bf16.msra.mxu0 %v743
        %809 = vmatprep.subr.bf16.mxu0 %v746
        %810 = vmatpush1.bf16.msra.mxu0 %v745
        %811 = vmatprep.subr.bf16.mxu0 %v748
        %812 = vmatpush1.bf16.msra.mxu0 %v747
        %813 = vmatprep.subr.bf16.mxu0 %v750
        %814 = vmatpush1.bf16.msra.mxu0 %v749
        %815 = vmatprep.subr.bf16.mxu0 %v752
        %816 = vmatpush1.bf16.msra.mxu0 %v751
        %817 = vmatprep.subr.bf16.mxu0 %v754
        %818 = vmatpush1.bf16.msra.mxu0 %v753
        %819 = vmatprep.subr.bf16.mxu0 %v756
        %820 = vmatpush1.bf16.msra.mxu0 %v755
        %821 = vmatprep.subr.bf16.mxu0 %v758
        %822 = vmatpush1.bf16.msra.mxu0 %v757
        %823 = vmatprep.subr.bf16.mxu0 %v760
        %824 = vmatpush1.bf16.msra.mxu0 %v759
        %825 = vmatprep.subr.bf16.mxu0 %v762
        %826 = vmatpush1.bf16.msra.mxu0 %v761
        %827 = vmatprep.subr.bf16.mxu0 %v764
        %828 = vmatpush1.bf16.msra.mxu0 %v763
        %829 = vmatprep.subr.bf16.mxu0 %v766
        %830 = vmatpush1.bf16.msra.mxu0 %v765
        %831 = vmatprep.subr.bf16.mxu0 %v768
        %832 = vmatpush1.bf16.msra.mxu0 %v767
        %833 = vmatprep.subr.bf16.mxu0 %v770
        %834 = vmatpush1.bf16.msra.mxu0 %v769
        %835 = vmatprep.mubr.bf16.mxu0 %v307
        %836 = vmatmul.mubr.bf16.gmra.mrb[0].mxu0 %v306
        %v837 = vpop.f32.mrb[0].mxu0
        %v838 = vadd.f32 0.0, %v837
        %v839 = vpop.f32.mrb[0].mxu0
        %v840 = vadd.f32 0.0, %v839
        %v841 = vpop.f32.mrb[0].mxu0
        %v842 = vadd.f32 0.0, %v841
        %v843 = vpop.f32.mrb[0].mxu0
        %v844 = vadd.f32 0.0, %v843
        %845 = vdwg.mxu0
        %v846 = vrot.slane %v569, 7
        %v847 = vrot.slane %v571, 7
        %v848 = vrot.slane %v573, 7
        %v849 = vrot.slane %v575, 7
        %vm850 = vcmp.lt.s32.totalorder %v309, 1
        %v851 = vsel %vm850, %v846, %v848
        %v852 = vsel %vm850, %v847, %v849
        %v853 = vsel %vm850, %v848, %v846
        %v854 = vsel %vm850, %v849, %v847
        %v855 = vsel %vm335, 0.0, %v853
        %v856 = vsel %vm335, 0.0, %v854
        %v857 = vsel %vm336, 0.0, %v851
        %v858 = vsel %vm336, 0.0, %v852
        %v859 = vrot.slane %v838, 1
        %v860 = vrot.slane %v840, 1
        %v861 = vrot.slane %v842, 1
        %v862 = vrot.slane %v844, 1
        %vm863 = vcmp.lt.s32.totalorder %v309, 7
        %v864 = vsel %vm863, %v859, %v861
        %v865 = vsel %vm863, %v860, %v862
        %v866 = vsel %vm863, %v861, %v859
        %v867 = vsel %vm863, %v862, %v860
        %v868 = vsel %vm337, 0.0, %v864
        %v869 = vsel %vm337, 0.0, %v865
        %v870 = vsel %vm338, 0.0, %v866
        %v871 = vsel %vm338, 0.0, %v867
        %v904 = vunpack.c.l.b16 %v578
        %v905 = vunpack.c.h.b16 %v578
        %v906 = vunpack.c.l.b16 %v579
        %v907 = vunpack.c.h.b16 %v579
        %v908 = vunpack.c.l.b16 %v580
        %v909 = vunpack.c.h.b16 %v580
        %v910 = vunpack.c.l.b16 %v581
        %v911 = vunpack.c.h.b16 %v581
        %v912 = vunpack.c.l.b16 %v582
        %v913 = vunpack.c.h.b16 %v582
        %v914 = vunpack.c.l.b16 %v583
        %v915 = vunpack.c.h.b16 %v583
        %v916 = vunpack.c.l.b16 %v584
        %v917 = vunpack.c.h.b16 %v584
        %v918 = vunpack.c.l.b16 %v585
        %v919 = vunpack.c.h.b16 %v585
        %v920 = vunpack.c.l.b16 %v586
        %v921 = vunpack.c.h.b16 %v586
        %v922 = vunpack.c.l.b16 %v587
        %v923 = vunpack.c.h.b16 %v587
        %v924 = vunpack.c.l.b16 %v588
        %v925 = vunpack.c.h.b16 %v588
        %v926 = vunpack.c.l.b16 %v589
        %v927 = vunpack.c.h.b16 %v589
        %v928 = vunpack.c.l.b16 %v590
        %v929 = vunpack.c.h.b16 %v590
        %v930 = vunpack.c.l.b16 %v591
        %v931 = vunpack.c.h.b16 %v591
        %v932 = vunpack.c.l.b16 %v592
        %v933 = vunpack.c.h.b16 %v592
        %v934 = vunpack.c.l.b16 %v593
        %v935 = vunpack.c.h.b16 %v593
        %v936 = vunpack.c.l.b16 %v594
        %v937 = vunpack.c.h.b16 %v594
        %v938 = vunpack.c.l.b16 %v595
        %v939 = vunpack.c.h.b16 %v595
        %v940 = vunpack.c.l.b16 %v596
        %v941 = vunpack.c.h.b16 %v596
        %v942 = vunpack.c.l.b16 %v597
        %v943 = vunpack.c.h.b16 %v597
        %v944 = vunpack.c.l.b16 %v598
        %v945 = vunpack.c.h.b16 %v598
        %v946 = vunpack.c.l.b16 %v599
        %v947 = vunpack.c.h.b16 %v599
        %v948 = vunpack.c.l.b16 %v600
        %v949 = vunpack.c.h.b16 %v600
        %v950 = vunpack.c.l.b16 %v601
        %v951 = vunpack.c.h.b16 %v601
        %v952 = vunpack.c.l.b16 %v602
        %v953 = vunpack.c.h.b16 %v602
        %v954 = vunpack.c.l.b16 %v603
        %v955 = vunpack.c.h.b16 %v603
        %v956 = vunpack.c.l.b16 %v604
        %v957 = vunpack.c.h.b16 %v604
        %v958 = vunpack.c.l.b16 %v605
        %v959 = vunpack.c.h.b16 %v605
        %v960 = vunpack.c.l.b16 %v606
        %v961 = vunpack.c.h.b16 %v606
        %v962 = vunpack.c.l.b16 %v607
        %v963 = vunpack.c.h.b16 %v607
        %v964 = vunpack.c.l.b16 %v608
        %v965 = vunpack.c.h.b16 %v608
        %v966 = vunpack.c.l.b16 %v609
        %v967 = vunpack.c.h.b16 %v609
        %v968 = vpack.c.b16 %v906, %v904
        %v969 = vpack.c.b16 %v907, %v905
        %v970 = vpack.c.b16 %v910, %v908
        %v971 = vpack.c.b16 %v911, %v909
        %v972 = vpack.c.b16 %v914, %v912
        %v973 = vpack.c.b16 %v915, %v913
        %v974 = vpack.c.b16 %v918, %v916
        %v975 = vpack.c.b16 %v919, %v917
        %v976 = vpack.c.b16 %v922, %v920
        %v977 = vpack.c.b16 %v923, %v921
        %v978 = vpack.c.b16 %v926, %v924
        %v979 = vpack.c.b16 %v927, %v925
        %v980 = vpack.c.b16 %v930, %v928
        %v981 = vpack.c.b16 %v931, %v929
        %v982 = vpack.c.b16 %v934, %v932
        %v983 = vpack.c.b16 %v935, %v933
        %v984 = vpack.c.b16 %v938, %v936
        %v985 = vpack.c.b16 %v939, %v937
        %v986 = vpack.c.b16 %v942, %v940
        %v987 = vpack.c.b16 %v943, %v941
        %v988 = vpack.c.b16 %v946, %v944
        %v989 = vpack.c.b16 %v947, %v945
        %v990 = vpack.c.b16 %v950, %v948
        %v991 = vpack.c.b16 %v951, %v949
        %v992 = vpack.c.b16 %v954, %v952
        %v993 = vpack.c.b16 %v955, %v953
        %v994 = vpack.c.b16 %v958, %v956
        %v995 = vpack.c.b16 %v959, %v957
        %v996 = vpack.c.b16 %v962, %v960
        %v997 = vpack.c.b16 %v963, %v961
        %v998 = vpack.c.b16 %v966, %v964
        %v999 = vpack.c.b16 %v967, %v965
        %1032 = vmatprep.subr.bf16.mxu0 %v969
        %1033 = vmatpush1.bf16.msra.mxu0 %v968
        %1034 = vmatprep.subr.bf16.mxu0 %v971
        %1035 = vmatpush1.bf16.msra.mxu0 %v970
        %1036 = vmatprep.subr.bf16.mxu0 %v973
        %1037 = vmatpush1.bf16.msra.mxu0 %v972
        %1038 = vmatprep.subr.bf16.mxu0 %v975
        %1039 = vmatpush1.bf16.msra.mxu0 %v974
        %1040 = vmatprep.subr.bf16.mxu0 %v977
        %1041 = vmatpush1.bf16.msra.mxu0 %v976
        %1042 = vmatprep.subr.bf16.mxu0 %v979
        %1043 = vmatpush1.bf16.msra.mxu0 %v978
        %1044 = vmatprep.subr.bf16.mxu0 %v981
        %1045 = vmatpush1.bf16.msra.mxu0 %v980
        %1046 = vmatprep.subr.bf16.mxu0 %v983
        %1047 = vmatpush1.bf16.msra.mxu0 %v982
        %1048 = vmatprep.subr.bf16.mxu0 %v985
        %1049 = vmatpush1.bf16.msra.mxu0 %v984
        %1050 = vmatprep.subr.bf16.mxu0 %v987
        %1051 = vmatpush1.bf16.msra.mxu0 %v986
        %1052 = vmatprep.subr.bf16.mxu0 %v989
        %1053 = vmatpush1.bf16.msra.mxu0 %v988
        %1054 = vmatprep.subr.bf16.mxu0 %v991
        %1055 = vmatpush1.bf16.msra.mxu0 %v990
        %1056 = vmatprep.subr.bf16.mxu0 %v993
        %1057 = vmatpush1.bf16.msra.mxu0 %v992
        %1058 = vmatprep.subr.bf16.mxu0 %v995
        %1059 = vmatpush1.bf16.msra.mxu0 %v994
        %1060 = vmatprep.subr.bf16.mxu0 %v997
        %1061 = vmatpush1.bf16.msra.mxu0 %v996
        %1062 = vmatprep.subr.bf16.mxu0 %v999
        %1063 = vmatpush1.bf16.msra.mxu0 %v998
        %1064 = vmatprep.mubr.bf16.mxu0 %v307
        %1065 = vmatmul.mubr.bf16.gmra.mrb[0].mxu0 %v306
        %v1066 = vpop.f32.mrb[0].mxu0
        %v1067 = vadd.f32 %v855, %v1066
        %v1068 = vpop.f32.mrb[0].mxu0
        %v1069 = vadd.f32 %v856, %v1068
        %v1070 = vpop.f32.mrb[0].mxu0
        %v1071 = vadd.f32 %v857, %v1070
        %v1072 = vpop.f32.mrb[0].mxu0
        %v1073 = vadd.f32 %v858, %v1072
        %1074 = vdwg.mxu0
        %v1075 = vadd.f32 %v1067, %v868
        %v1076 = vadd.f32 %v1069, %v869
        %v1077 = vadd.f32 %v1071, %v870
        %v1078 = vadd.f32 %v1073, %v871
        %v1080 = vlaneseq
        %v1081 = vshrl.u32 %v1080, 7
        %v1082 = vsub.s32 0, %v1081
        %v1083 = vrot.slane %v339, %v1082
        %v1084 = vlaneseq
        %v1085 = vshrl.u32 %v1084, 7
        %v1086 = vsub.s32 1, %v1085
        %v1087 = vrot.slane %v339, %v1086
        %v1090 = vadd.f32 %v1075, %v1083
        %v1091 = vadd.f32 %v1076, %v1087
        %v1092 = vadd.f32 %v1077, %v1083
        %v1093 = vadd.f32 %v1078, %v1087
        %vm1094 = vcmp.gt.f32.partialorder %v1090, 0.0
        %vm1095 = vcmp.gt.f32.partialorder %v1091, 0.0
        %vm1096 = vcmp.gt.f32.partialorder %v1092, 0.0
        %vm1097 = vcmp.gt.f32.partialorder %v1093, 0.0
        %v1099 = vlaneseq
        %v1100 = vshrl.u32 %v1099, 7
        %v1101 = vsub.s32 0, %v1100
        %v1102 = vrot.slane %v341, %v1101
        %v1103 = vlaneseq
        %v1104 = vshrl.u32 %v1103, 7
        %v1105 = vsub.s32 1, %v1104
        %v1106 = vrot.slane %v341, %v1105
        %v1109 = vmul.f32 %v1102, %v1090
        %v1110 = vmul.f32 %v1106, %v1091
        %v1111 = vmul.f32 %v1102, %v1092
        %v1112 = vmul.f32 %v1106, %v1093
        %v1113 = vsel %vm1094, %v1090, %v1109
        %v1114 = vsel %vm1095, %v1091, %v1110
        %v1115 = vsel %vm1096, %v1092, %v1111
        %v1116 = vsel %vm1097, %v1093, %v1112
        %v1117 = vpack.c.bf16 %v1115, %v1113
        %v1118 = vpack.c.bf16 %v1116, %v1114
        %v1119 = vld [vmem:[#allocation7] sm:$0xff]
        %v1120 = vld [vmem:[#allocation7 + $0x8] sm:$0xff]
        %v1121 = vld [vmem:[#allocation7 + $0x10] sm:$0xff]
        %v1122 = vld [vmem:[#allocation7 + $0x18] sm:$0xff]
        %v1123 = vld [vmem:[#allocation7 + $0x20] sm:$0xff]
        %v1124 = vld [vmem:[#allocation7 + $0x28] sm:$0xff]
        %v1125 = vld [vmem:[#allocation7 + $0x30] sm:$0xff]
        %v1126 = vld [vmem:[#allocation7 + $0x38] sm:$0xff]
        %v1127 = vld [vmem:[#allocation7 + $0x40] sm:$0xff]
        %v1128 = vld [vmem:[#allocation7 + $0x48] sm:$0xff]
        %v1129 = vld [vmem:[#allocation7 + $0x50] sm:$0xff]
        %v1130 = vld [vmem:[#allocation7 + $0x58] sm:$0xff]
        %v1131 = vld [vmem:[#allocation7 + $0x60] sm:$0xff]
        %v1132 = vld [vmem:[#allocation7 + $0x68] sm:$0xff]
        %v1133 = vld [vmem:[#allocation7 + $0x70] sm:$0xff]
        %v1134 = vld [vmem:[#allocation7 + $0x78] sm:$0xff]
        %v1135 = vld [vmem:[#allocation7 + $0x80] sm:$0xff]
        %v1136 = vld [vmem:[#allocation7 + $0x88] sm:$0xff]
        %v1137 = vld [vmem:[#allocation7 + $0x90] sm:$0xff]
        %v1138 = vld [vmem:[#allocation7 + $0x98] sm:$0xff]
        %v1139 = vld [vmem:[#allocation7 + $0xa0] sm:$0xff]
        %v1140 = vld [vmem:[#allocation7 + $0xa8] sm:$0xff]
        %v1141 = vld [vmem:[#allocation7 + $0xb0] sm:$0xff]
        %v1142 = vld [vmem:[#allocation7 + $0xb8] sm:$0xff]
        %v1143 = vld [vmem:[#allocation7 + $0xc0] sm:$0xff]
        %v1144 = vld [vmem:[#allocation7 + $0xc8] sm:$0xff]
        %v1145 = vld [vmem:[#allocation7 + $0xd0] sm:$0xff]
        %v1146 = vld [vmem:[#allocation7 + $0xd8] sm:$0xff]
        %v1147 = vld [vmem:[#allocation7 + $0xe0] sm:$0xff]
        %v1148 = vld [vmem:[#allocation7 + $0xe8] sm:$0xff]
        %v1149 = vld [vmem:[#allocation7 + $0xf0] sm:$0xff]
        %v1150 = vld [vmem:[#allocation7 + $0xf8] sm:$0xff]
        %v1183 = vunpack.c.l.b16 %v1119
        %v1184 = vunpack.c.h.b16 %v1119
        %v1185 = vunpack.c.l.b16 %v1120
        %v1186 = vunpack.c.h.b16 %v1120
        %v1187 = vunpack.c.l.b16 %v1121
        %v1188 = vunpack.c.h.b16 %v1121
        %v1189 = vunpack.c.l.b16 %v1122
        %v1190 = vunpack.c.h.b16 %v1122
        %v1191 = vunpack.c.l.b16 %v1123
        %v1192 = vunpack.c.h.b16 %v1123
        %v1193 = vunpack.c.l.b16 %v1124
        %v1194 = vunpack.c.h.b16 %v1124
        %v1195 = vunpack.c.l.b16 %v1125
        %v1196 = vunpack.c.h.b16 %v1125
        %v1197 = vunpack.c.l.b16 %v1126
        %v1198 = vunpack.c.h.b16 %v1126
        %v1199 = vunpack.c.l.b16 %v1127
        %v1200 = vunpack.c.h.b16 %v1127
        %v1201 = vunpack.c.l.b16 %v1128
        %v1202 = vunpack.c.h.b16 %v1128
        %v1203 = vunpack.c.l.b16 %v1129
        %v1204 = vunpack.c.h.b16 %v1129
        %v1205 = vunpack.c.l.b16 %v1130
        %v1206 = vunpack.c.h.b16 %v1130
        %v1207 = vunpack.c.l.b16 %v1131
        %v1208 = vunpack.c.h.b16 %v1131
        %v1209 = vunpack.c.l.b16 %v1132
        %v1210 = vunpack.c.h.b16 %v1132
        %v1211 = vunpack.c.l.b16 %v1133
        %v1212 = vunpack.c.h.b16 %v1133
        %v1213 = vunpack.c.l.b16 %v1134
        %v1214 = vunpack.c.h.b16 %v1134
        %v1215 = vunpack.c.l.b16 %v1135
        %v1216 = vunpack.c.h.b16 %v1135
        %v1217 = vunpack.c.l.b16 %v1136
        %v1218 = vunpack.c.h.b16 %v1136
        %v1219 = vunpack.c.l.b16 %v1137
        %v1220 = vunpack.c.h.b16 %v1137
        %v1221 = vunpack.c.l.b16 %v1138
        %v1222 = vunpack.c.h.b16 %v1138
        %v1223 = vunpack.c.l.b16 %v1139
        %v1224 = vunpack.c.h.b16 %v1139
        %v1225 = vunpack.c.l.b16 %v1140
        %v1226 = vunpack.c.h.b16 %v1140
        %v1227 = vunpack.c.l.b16 %v1141
        %v1228 = vunpack.c.h.b16 %v1141
        %v1229 = vunpack.c.l.b16 %v1142
        %v1230 = vunpack.c.h.b16 %v1142
        %v1231 = vunpack.c.l.b16 %v1143
        %v1232 = vunpack.c.h.b16 %v1143
        %v1233 = vunpack.c.l.b16 %v1144
        %v1234 = vunpack.c.h.b16 %v1144
        %v1235 = vunpack.c.l.b16 %v1145
        %v1236 = vunpack.c.h.b16 %v1145
        %v1237 = vunpack.c.l.b16 %v1146
        %v1238 = vunpack.c.h.b16 %v1146
        %v1239 = vunpack.c.l.b16 %v1147
        %v1240 = vunpack.c.h.b16 %v1147
        %v1241 = vunpack.c.l.b16 %v1148
        %v1242 = vunpack.c.h.b16 %v1148
        %v1243 = vunpack.c.l.b16 %v1149
        %v1244 = vunpack.c.h.b16 %v1149
        %v1245 = vunpack.c.l.b16 %v1150
        %v1246 = vunpack.c.h.b16 %v1150
        %v1247 = vpack.c.b16 %v1185, %v1183
        %v1248 = vpack.c.b16 %v1186, %v1184
        %v1249 = vpack.c.b16 %v1189, %v1187
        %v1250 = vpack.c.b16 %v1190, %v1188
        %v1251 = vpack.c.b16 %v1193, %v1191
        %v1252 = vpack.c.b16 %v1194, %v1192
        %v1253 = vpack.c.b16 %v1197, %v1195
        %v1254 = vpack.c.b16 %v1198, %v1196
        %v1255 = vpack.c.b16 %v1201, %v1199
        %v1256 = vpack.c.b16 %v1202, %v1200
        %v1257 = vpack.c.b16 %v1205, %v1203
        %v1258 = vpack.c.b16 %v1206, %v1204
        %v1259 = vpack.c.b16 %v1209, %v1207
        %v1260 = vpack.c.b16 %v1210, %v1208
        %v1261 = vpack.c.b16 %v1213, %v1211
        %v1262 = vpack.c.b16 %v1214, %v1212
        %v1263 = vpack.c.b16 %v1217, %v1215
        %v1264 = vpack.c.b16 %v1218, %v1216
        %v1265 = vpack.c.b16 %v1221, %v1219
        %v1266 = vpack.c.b16 %v1222, %v1220
        %v1267 = vpack.c.b16 %v1225, %v1223
        %v1268 = vpack.c.b16 %v1226, %v1224
        %v1269 = vpack.c.b16 %v1229, %v1227
        %v1270 = vpack.c.b16 %v1230, %v1228
        %v1271 = vpack.c.b16 %v1233, %v1231
        %v1272 = vpack.c.b16 %v1234, %v1232
        %v1273 = vpack.c.b16 %v1237, %v1235
        %v1274 = vpack.c.b16 %v1238, %v1236
        %v1275 = vpack.c.b16 %v1241, %v1239
        %v1276 = vpack.c.b16 %v1242, %v1240
        %v1277 = vpack.c.b16 %v1245, %v1243
        %v1278 = vpack.c.b16 %v1246, %v1244
        %1311 = vmatprep.subr.bf16.mxu0 %v1248
        %1312 = vmatpush1.bf16.msra.mxu0 %v1247
        %1313 = vmatprep.subr.bf16.mxu0 %v1250
        %1314 = vmatpush1.bf16.msra.mxu0 %v1249
        %1315 = vmatprep.subr.bf16.mxu0 %v1252
        %1316 = vmatpush1.bf16.msra.mxu0 %v1251
        %1317 = vmatprep.subr.bf16.mxu0 %v1254
        %1318 = vmatpush1.bf16.msra.mxu0 %v1253
        %1319 = vmatprep.subr.bf16.mxu0 %v1256
        %1320 = vmatpush1.bf16.msra.mxu0 %v1255
        %1321 = vmatprep.subr.bf16.mxu0 %v1258
        %1322 = vmatpush1.bf16.msra.mxu0 %v1257
        %1323 = vmatprep.subr.bf16.mxu0 %v1260
        %1324 = vmatpush1.bf16.msra.mxu0 %v1259
        %1325 = vmatprep.subr.bf16.mxu0 %v1262
        %1326 = vmatpush1.bf16.msra.mxu0 %v1261
        %1327 = vmatprep.subr.bf16.mxu0 %v1264
        %1328 = vmatpush1.bf16.msra.mxu0 %v1263
        %1329 = vmatprep.subr.bf16.mxu0 %v1266
        %1330 = vmatpush1.bf16.msra.mxu0 %v1265
        %1331 = vmatprep.subr.bf16.mxu0 %v1268
        %1332 = vmatpush1.bf16.msra.mxu0 %v1267
        %1333 = vmatprep.subr.bf16.mxu0 %v1270
        %1334 = vmatpush1.bf16.msra.mxu0 %v1269
        %1335 = vmatprep.subr.bf16.mxu0 %v1272
        %1336 = vmatpush1.bf16.msra.mxu0 %v1271
        %1337 = vmatprep.subr.bf16.mxu0 %v1274
        %1338 = vmatpush1.bf16.msra.mxu0 %v1273
        %1339 = vmatprep.subr.bf16.mxu0 %v1276
        %1340 = vmatpush1.bf16.msra.mxu0 %v1275
        %1341 = vmatprep.subr.bf16.mxu0 %v1278
        %1342 = vmatpush1.bf16.msra.mxu0 %v1277
        %1343 = vmatprep.mubr.bf16.mxu0 %v1118
        %1344 = vmatmul.mubr.bf16.gmra.mrb[0].mxu0 %v1117
        %v1345 = vpop.f32.mrb[0].mxu0
        %v1346 = vadd.f32 0.0, %v1345
        %v1347 = vpop.f32.mrb[0].mxu0
        %v1348 = vadd.f32 0.0, %v1347
        %v1349 = vpop.f32.mrb[0].mxu0
        %v1350 = vadd.f32 0.0, %v1349
        %v1351 = vpop.f32.mrb[0].mxu0
        %v1352 = vadd.f32 0.0, %v1351
        %1353 = vdwg.mxu0
        %s1354 = scalar_lea.vmem [#allocation7], 256
        %v1355 = vld [vmem:[%s1354] sm:$0xff]
        %v1356 = vld [vmem:[%s1354 + $0x8] sm:$0xff]
        %v1357 = vld [vmem:[%s1354 + $0x10] sm:$0xff]
        %v1358 = vld [vmem:[%s1354 + $0x18] sm:$0xff]
        %v1359 = vld [vmem:[%s1354 + $0x20] sm:$0xff]
        %v1360 = vld [vmem:[%s1354 + $0x28] sm:$0xff]
        %v1361 = vld [vmem:[%s1354 + $0x30] sm:$0xff]
        %v1362 = vld [vmem:[%s1354 + $0x38] sm:$0xff]
        %v1363 = vld [vmem:[%s1354 + $0x40] sm:$0xff]
        %v1364 = vld [vmem:[%s1354 + $0x48] sm:$0xff]
        %v1365 = vld [vmem:[%s1354 + $0x50] sm:$0xff]
        %v1366 = vld [vmem:[%s1354 + $0x58] sm:$0xff]
        %v1367 = vld [vmem:[%s1354 + $0x60] sm:$0xff]
        %v1368 = vld [vmem:[%s1354 + $0x68] sm:$0xff]
        %v1369 = vld [vmem:[%s1354 + $0x70] sm:$0xff]
        %v1370 = vld [vmem:[%s1354 + $0x78] sm:$0xff]
        %v1371 = vld [vmem:[%s1354 + $0x80] sm:$0xff]
        %v1372 = vld [vmem:[%s1354 + $0x88] sm:$0xff]
        %v1373 = vld [vmem:[%s1354 + $0x90] sm:$0xff]
        %v1374 = vld [vmem:[%s1354 + $0x98] sm:$0xff]
        %v1375 = vld [vmem:[%s1354 + $0xa0] sm:$0xff]
        %v1376 = vld [vmem:[%s1354 + $0xa8] sm:$0xff]
        %v1377 = vld [vmem:[%s1354 + $0xb0] sm:$0xff]
        %v1378 = vld [vmem:[%s1354 + $0xb8] sm:$0xff]
        %v1379 = vld [vmem:[%s1354 + $0xc0] sm:$0xff]
        %v1380 = vld [vmem:[%s1354 + $0xc8] sm:$0xff]
        %v1381 = vld [vmem:[%s1354 + $0xd0] sm:$0xff]
        %v1382 = vld [vmem:[%s1354 + $0xd8] sm:$0xff]
        %v1383 = vld [vmem:[%s1354 + $0xe0] sm:$0xff]
        %v1384 = vld [vmem:[%s1354 + $0xe8] sm:$0xff]
        %v1385 = vld [vmem:[%s1354 + $0xf0] sm:$0xff]
        %v1386 = vld [vmem:[%s1354 + $0xf8] sm:$0xff]
        %s1387 = scalar_lea.vmem [#allocation7], 512
        %v1388 = vld [vmem:[%s1387] sm:$0xff]
        %v1389 = vld [vmem:[%s1387 + $0x8] sm:$0xff]
        %v1390 = vld [vmem:[%s1387 + $0x10] sm:$0xff]
        %v1391 = vld [vmem:[%s1387 + $0x18] sm:$0xff]
        %v1392 = vld [vmem:[%s1387 + $0x20] sm:$0xff]
        %v1393 = vld [vmem:[%s1387 + $0x28] sm:$0xff]
        %v1394 = vld [vmem:[%s1387 + $0x30] sm:$0xff]
        %v1395 = vld [vmem:[%s1387 + $0x38] sm:$0xff]
        %v1396 = vld [vmem:[%s1387 + $0x40] sm:$0xff]
        %v1397 = vld [vmem:[%s1387 + $0x48] sm:$0xff]
        %v1398 = vld [vmem:[%s1387 + $0x50] sm:$0xff]
        %v1399 = vld [vmem:[%s1387 + $0x58] sm:$0xff]
        %v1400 = vld [vmem:[%s1387 + $0x60] sm:$0xff]
        %v1401 = vld [vmem:[%s1387 + $0x68] sm:$0xff]
        %v1402 = vld [vmem:[%s1387 + $0x70] sm:$0xff]
        %v1403 = vld [vmem:[%s1387 + $0x78] sm:$0xff]
        %v1404 = vld [vmem:[%s1387 + $0x80] sm:$0xff]
        %v1405 = vld [vmem:[%s1387 + $0x88] sm:$0xff]
        %v1406 = vld [vmem:[%s1387 + $0x90] sm:$0xff]
        %v1407 = vld [vmem:[%s1387 + $0x98] sm:$0xff]
        %v1408 = vld [vmem:[%s1387 + $0xa0] sm:$0xff]
        %v1409 = vld [vmem:[%s1387 + $0xa8] sm:$0xff]
        %v1410 = vld [vmem:[%s1387 + $0xb0] sm:$0xff]
        %v1411 = vld [vmem:[%s1387 + $0xb8] sm:$0xff]
        %v1412 = vld [vmem:[%s1387 + $0xc0] sm:$0xff]
        %v1413 = vld [vmem:[%s1387 + $0xc8] sm:$0xff]
        %v1414 = vld [vmem:[%s1387 + $0xd0] sm:$0xff]
        %v1415 = vld [vmem:[%s1387 + $0xd8] sm:$0xff]
        %v1416 = vld [vmem:[%s1387 + $0xe0] sm:$0xff]
        %v1417 = vld [vmem:[%s1387 + $0xe8] sm:$0xff]
        %v1418 = vld [vmem:[%s1387 + $0xf0] sm:$0xff]
        %v1419 = vld [vmem:[%s1387 + $0xf8] sm:$0xff]
        %v1452 = vunpack.c.l.b16 %v1388
        %v1453 = vunpack.c.h.b16 %v1388
        %v1454 = vunpack.c.l.b16 %v1389
        %v1455 = vunpack.c.h.b16 %v1389
        %v1456 = vunpack.c.l.b16 %v1390
        %v1457 = vunpack.c.h.b16 %v1390
        %v1458 = vunpack.c.l.b16 %v1391
        %v1459 = vunpack.c.h.b16 %v1391
        %v1460 = vunpack.c.l.b16 %v1392
        %v1461 = vunpack.c.h.b16 %v1392
        %v1462 = vunpack.c.l.b16 %v1393
        %v1463 = vunpack.c.h.b16 %v1393
        %v1464 = vunpack.c.l.b16 %v1394
        %v1465 = vunpack.c.h.b16 %v1394
        %v1466 = vunpack.c.l.b16 %v1395
        %v1467 = vunpack.c.h.b16 %v1395
        %v1468 = vunpack.c.l.b16 %v1396
        %v1469 = vunpack.c.h.b16 %v1396
        %v1470 = vunpack.c.l.b16 %v1397
        %v1471 = vunpack.c.h.b16 %v1397
        %v1472 = vunpack.c.l.b16 %v1398
        %v1473 = vunpack.c.h.b16 %v1398
        %v1474 = vunpack.c.l.b16 %v1399
        %v1475 = vunpack.c.h.b16 %v1399
        %v1476 = vunpack.c.l.b16 %v1400
        %v1477 = vunpack.c.h.b16 %v1400
        %v1478 = vunpack.c.l.b16 %v1401
        %v1479 = vunpack.c.h.b16 %v1401
        %v1480 = vunpack.c.l.b16 %v1402
        %v1481 = vunpack.c.h.b16 %v1402
        %v1482 = vunpack.c.l.b16 %v1403
        %v1483 = vunpack.c.h.b16 %v1403
        %v1484 = vunpack.c.l.b16 %v1404
        %v1485 = vunpack.c.h.b16 %v1404
        %v1486 = vunpack.c.l.b16 %v1405
        %v1487 = vunpack.c.h.b16 %v1405
        %v1488 = vunpack.c.l.b16 %v1406
        %v1489 = vunpack.c.h.b16 %v1406
        %v1490 = vunpack.c.l.b16 %v1407
        %v1491 = vunpack.c.h.b16 %v1407
        %v1492 = vunpack.c.l.b16 %v1408
        %v1493 = vunpack.c.h.b16 %v1408
        %v1494 = vunpack.c.l.b16 %v1409
        %v1495 = vunpack.c.h.b16 %v1409
        %v1496 = vunpack.c.l.b16 %v1410
        %v1497 = vunpack.c.h.b16 %v1410
        %v1498 = vunpack.c.l.b16 %v1411
        %v1499 = vunpack.c.h.b16 %v1411
        %v1500 = vunpack.c.l.b16 %v1412
        %v1501 = vunpack.c.h.b16 %v1412
        %v1502 = vunpack.c.l.b16 %v1413
        %v1503 = vunpack.c.h.b16 %v1413
        %v1504 = vunpack.c.l.b16 %v1414
        %v1505 = vunpack.c.h.b16 %v1414
        %v1506 = vunpack.c.l.b16 %v1415
        %v1507 = vunpack.c.h.b16 %v1415
        %v1508 = vunpack.c.l.b16 %v1416
        %v1509 = vunpack.c.h.b16 %v1416
        %v1510 = vunpack.c.l.b16 %v1417
        %v1511 = vunpack.c.h.b16 %v1417
        %v1512 = vunpack.c.l.b16 %v1418
        %v1513 = vunpack.c.h.b16 %v1418
        %v1514 = vunpack.c.l.b16 %v1419
        %v1515 = vunpack.c.h.b16 %v1419
        %v1516 = vpack.c.b16 %v1454, %v1452
        %v1517 = vpack.c.b16 %v1455, %v1453
        %v1518 = vpack.c.b16 %v1458, %v1456
        %v1519 = vpack.c.b16 %v1459, %v1457
        %v1520 = vpack.c.b16 %v1462, %v1460
        %v1521 = vpack.c.b16 %v1463, %v1461
        %v1522 = vpack.c.b16 %v1466, %v1464
        %v1523 = vpack.c.b16 %v1467, %v1465
        %v1524 = vpack.c.b16 %v1470, %v1468
        %v1525 = vpack.c.b16 %v1471, %v1469
        %v1526 = vpack.c.b16 %v1474, %v1472
        %v1527 = vpack.c.b16 %v1475, %v1473
        %v1528 = vpack.c.b16 %v1478, %v1476
        %v1529 = vpack.c.b16 %v1479, %v1477
        %v1530 = vpack.c.b16 %v1482, %v1480
        %v1531 = vpack.c.b16 %v1483, %v1481
        %v1532 = vpack.c.b16 %v1486, %v1484
        %v1533 = vpack.c.b16 %v1487, %v1485
        %v1534 = vpack.c.b16 %v1490, %v1488
        %v1535 = vpack.c.b16 %v1491, %v1489
        %v1536 = vpack.c.b16 %v1494, %v1492
        %v1537 = vpack.c.b16 %v1495, %v1493
        %v1538 = vpack.c.b16 %v1498, %v1496
        %v1539 = vpack.c.b16 %v1499, %v1497
        %v1540 = vpack.c.b16 %v1502, %v1500
        %v1541 = vpack.c.b16 %v1503, %v1501
        %v1542 = vpack.c.b16 %v1506, %v1504
        %v1543 = vpack.c.b16 %v1507, %v1505
        %v1544 = vpack.c.b16 %v1510, %v1508
        %v1545 = vpack.c.b16 %v1511, %v1509
        %v1546 = vpack.c.b16 %v1514, %v1512
        %v1547 = vpack.c.b16 %v1515, %v1513
        %1580 = vmatprep.subr.bf16.mxu0 %v1517
        %1581 = vmatpush1.bf16.msra.mxu0 %v1516
        %1582 = vmatprep.subr.bf16.mxu0 %v1519
        %1583 = vmatpush1.bf16.msra.mxu0 %v1518
        %1584 = vmatprep.subr.bf16.mxu0 %v1521
        %1585 = vmatpush1.bf16.msra.mxu0 %v1520
        %1586 = vmatprep.subr.bf16.mxu0 %v1523
        %1587 = vmatpush1.bf16.msra.mxu0 %v1522
        %1588 = vmatprep.subr.bf16.mxu0 %v1525
        %1589 = vmatpush1.bf16.msra.mxu0 %v1524
        %1590 = vmatprep.subr.bf16.mxu0 %v1527
        %1591 = vmatpush1.bf16.msra.mxu0 %v1526
        %1592 = vmatprep.subr.bf16.mxu0 %v1529
        %1593 = vmatpush1.bf16.msra.mxu0 %v1528
        %1594 = vmatprep.subr.bf16.mxu0 %v1531
        %1595 = vmatpush1.bf16.msra.mxu0 %v1530
        %1596 = vmatprep.subr.bf16.mxu0 %v1533
        %1597 = vmatpush1.bf16.msra.mxu0 %v1532
        %1598 = vmatprep.subr.bf16.mxu0 %v1535
        %1599 = vmatpush1.bf16.msra.mxu0 %v1534
        %1600 = vmatprep.subr.bf16.mxu0 %v1537
        %1601 = vmatpush1.bf16.msra.mxu0 %v1536
        %1602 = vmatprep.subr.bf16.mxu0 %v1539
        %1603 = vmatpush1.bf16.msra.mxu0 %v1538
        %1604 = vmatprep.subr.bf16.mxu0 %v1541
        %1605 = vmatpush1.bf16.msra.mxu0 %v1540
        %1606 = vmatprep.subr.bf16.mxu0 %v1543
        %1607 = vmatpush1.bf16.msra.mxu0 %v1542
        %1608 = vmatprep.subr.bf16.mxu0 %v1545
        %1609 = vmatpush1.bf16.msra.mxu0 %v1544
        %1610 = vmatprep.subr.bf16.mxu0 %v1547
        %1611 = vmatpush1.bf16.msra.mxu0 %v1546
        %1612 = vmatprep.mubr.bf16.mxu0 %v1118
        %1613 = vmatmul.mubr.bf16.gmra.mrb[0].mxu0 %v1117
        %v1614 = vpop.f32.mrb[0].mxu0
        %v1615 = vadd.f32 0.0, %v1614
        %v1616 = vpop.f32.mrb[0].mxu0
        %v1617 = vadd.f32 0.0, %v1616
        %v1618 = vpop.f32.mrb[0].mxu0
        %v1619 = vadd.f32 0.0, %v1618
        %v1620 = vpop.f32.mrb[0].mxu0
        %v1621 = vadd.f32 0.0, %v1620
        %1622 = vdwg.mxu0
        %v1623 = vrot.slane %v1346, 7
        %v1624 = vrot.slane %v1348, 7
        %v1625 = vrot.slane %v1350, 7
        %v1626 = vrot.slane %v1352, 7
        %v1627 = vsel %vm850, %v1623, %v1625
        %v1628 = vsel %vm850, %v1624, %v1626
        %v1629 = vsel %vm850, %v1625, %v1623
        %v1630 = vsel %vm850, %v1626, %v1624
        %v1631 = vsel %vm335, 0.0, %v1629
        %v1632 = vsel %vm335, 0.0, %v1630
        %v1633 = vsel %vm336, 0.0, %v1627
        %v1634 = vsel %vm336, 0.0, %v1628
        %v1635 = vrot.slane %v1615, 1
        %v1636 = vrot.slane %v1617, 1
        %v1637 = vrot.slane %v1619, 1
        %v1638 = vrot.slane %v1621, 1
        %v1639 = vsel %vm863, %v1635, %v1637
        %v1640 = vsel %vm863, %v1636, %v1638
        %v1641 = vsel %vm863, %v1637, %v1635
        %v1642 = vsel %vm863, %v1638, %v1636
        %v1643 = vsel %vm337, 0.0, %v1639
        %v1644 = vsel %vm337, 0.0, %v1640
        %v1645 = vsel %vm338, 0.0, %v1641
        %v1646 = vsel %vm338, 0.0, %v1642
        %v1679 = vunpack.c.l.b16 %v1355
        %v1680 = vunpack.c.h.b16 %v1355
        %v1681 = vunpack.c.l.b16 %v1356
        %v1682 = vunpack.c.h.b16 %v1356
        %v1683 = vunpack.c.l.b16 %v1357
        %v1684 = vunpack.c.h.b16 %v1357
        %v1685 = vunpack.c.l.b16 %v1358
        %v1686 = vunpack.c.h.b16 %v1358
        %v1687 = vunpack.c.l.b16 %v1359
        %v1688 = vunpack.c.h.b16 %v1359
        %v1689 = vunpack.c.l.b16 %v1360
        %v1690 = vunpack.c.h.b16 %v1360
        %v1691 = vunpack.c.l.b16 %v1361
        %v1692 = vunpack.c.h.b16 %v1361
        %v1693 = vunpack.c.l.b16 %v1362
        %v1694 = vunpack.c.h.b16 %v1362
        %v1695 = vunpack.c.l.b16 %v1363
        %v1696 = vunpack.c.h.b16 %v1363
        %v1697 = vunpack.c.l.b16 %v1364
        %v1698 = vunpack.c.h.b16 %v1364
        %v1699 = vunpack.c.l.b16 %v1365
        %v1700 = vunpack.c.h.b16 %v1365
        %v1701 = vunpack.c.l.b16 %v1366
        %v1702 = vunpack.c.h.b16 %v1366
        %v1703 = vunpack.c.l.b16 %v1367
        %v1704 = vunpack.c.h.b16 %v1367
        %v1705 = vunpack.c.l.b16 %v1368
        %v1706 = vunpack.c.h.b16 %v1368
        %v1707 = vunpack.c.l.b16 %v1369
        %v1708 = vunpack.c.h.b16 %v1369
        %v1709 = vunpack.c.l.b16 %v1370
        %v1710 = vunpack.c.h.b16 %v1370
        %v1711 = vunpack.c.l.b16 %v1371
        %v1712 = vunpack.c.h.b16 %v1371
        %v1713 = vunpack.c.l.b16 %v1372
        %v1714 = vunpack.c.h.b16 %v1372
        %v1715 = vunpack.c.l.b16 %v1373
        %v1716 = vunpack.c.h.b16 %v1373
        %v1717 = vunpack.c.l.b16 %v1374
        %v1718 = vunpack.c.h.b16 %v1374
        %v1719 = vunpack.c.l.b16 %v1375
        %v1720 = vunpack.c.h.b16 %v1375
        %v1721 = vunpack.c.l.b16 %v1376
        %v1722 = vunpack.c.h.b16 %v1376
        %v1723 = vunpack.c.l.b16 %v1377
        %v1724 = vunpack.c.h.b16 %v1377
        %v1725 = vunpack.c.l.b16 %v1378
        %v1726 = vunpack.c.h.b16 %v1378
        %v1727 = vunpack.c.l.b16 %v1379
        %v1728 = vunpack.c.h.b16 %v1379
        %v1729 = vunpack.c.l.b16 %v1380
        %v1730 = vunpack.c.h.b16 %v1380
        %v1731 = vunpack.c.l.b16 %v1381
        %v1732 = vunpack.c.h.b16 %v1381
        %v1733 = vunpack.c.l.b16 %v1382
        %v1734 = vunpack.c.h.b16 %v1382
        %v1735 = vunpack.c.l.b16 %v1383
        %v1736 = vunpack.c.h.b16 %v1383
        %v1737 = vunpack.c.l.b16 %v1384
        %v1738 = vunpack.c.h.b16 %v1384
        %v1739 = vunpack.c.l.b16 %v1385
        %v1740 = vunpack.c.h.b16 %v1385
        %v1741 = vunpack.c.l.b16 %v1386
        %v1742 = vunpack.c.h.b16 %v1386
        %v1743 = vpack.c.b16 %v1681, %v1679
        %v1744 = vpack.c.b16 %v1682, %v1680
        %v1745 = vpack.c.b16 %v1685, %v1683
        %v1746 = vpack.c.b16 %v1686, %v1684
        %v1747 = vpack.c.b16 %v1689, %v1687
        %v1748 = vpack.c.b16 %v1690, %v1688
        %v1749 = vpack.c.b16 %v1693, %v1691
        %v1750 = vpack.c.b16 %v1694, %v1692
        %v1751 = vpack.c.b16 %v1697, %v1695
        %v1752 = vpack.c.b16 %v1698, %v1696
        %v1753 = vpack.c.b16 %v1701, %v1699
        %v1754 = vpack.c.b16 %v1702, %v1700
        %v1755 = vpack.c.b16 %v1705, %v1703
        %v1756 = vpack.c.b16 %v1706, %v1704
        %v1757 = vpack.c.b16 %v1709, %v1707
        %v1758 = vpack.c.b16 %v1710, %v1708
        %v1759 = vpack.c.b16 %v1713, %v1711
        %v1760 = vpack.c.b16 %v1714, %v1712
        %v1761 = vpack.c.b16 %v1717, %v1715
        %v1762 = vpack.c.b16 %v1718, %v1716
        %v1763 = vpack.c.b16 %v1721, %v1719
        %v1764 = vpack.c.b16 %v1722, %v1720
        %v1765 = vpack.c.b16 %v1725, %v1723
        %v1766 = vpack.c.b16 %v1726, %v1724
        %v1767 = vpack.c.b16 %v1729, %v1727
        %v1768 = vpack.c.b16 %v1730, %v1728
        %v1769 = vpack.c.b16 %v1733, %v1731
        %v1770 = vpack.c.b16 %v1734, %v1732
        %v1771 = vpack.c.b16 %v1737, %v1735
        %v1772 = vpack.c.b16 %v1738, %v1736
        %v1773 = vpack.c.b16 %v1741, %v1739
        %v1774 = vpack.c.b16 %v1742, %v1740
        %1807 = vmatprep.subr.bf16.mxu0 %v1744
        %1808 = vmatpush1.bf16.msra.mxu0 %v1743
        %1809 = vmatprep.subr.bf16.mxu0 %v1746
        %1810 = vmatpush1.bf16.msra.mxu0 %v1745
        %1811 = vmatprep.subr.bf16.mxu0 %v1748
        %1812 = vmatpush1.bf16.msra.mxu0 %v1747
        %1813 = vmatprep.subr.bf16.mxu0 %v1750
        %1814 = vmatpush1.bf16.msra.mxu0 %v1749
        %1815 = vmatprep.subr.bf16.mxu0 %v1752
        %1816 = vmatpush1.bf16.msra.mxu0 %v1751
        %1817 = vmatprep.subr.bf16.mxu0 %v1754
        %1818 = vmatpush1.bf16.msra.mxu0 %v1753
        %1819 = vmatprep.subr.bf16.mxu0 %v1756
        %1820 = vmatpush1.bf16.msra.mxu0 %v1755
        %1821 = vmatprep.subr.bf16.mxu0 %v1758
        %1822 = vmatpush1.bf16.msra.mxu0 %v1757
        %1823 = vmatprep.subr.bf16.mxu0 %v1760
        %1824 = vmatpush1.bf16.msra.mxu0 %v1759
        %1825 = vmatprep.subr.bf16.mxu0 %v1762
        %1826 = vmatpush1.bf16.msra.mxu0 %v1761
        %1827 = vmatprep.subr.bf16.mxu0 %v1764
        %1828 = vmatpush1.bf16.msra.mxu0 %v1763
        %1829 = vmatprep.subr.bf16.mxu0 %v1766
        %1830 = vmatpush1.bf16.msra.mxu0 %v1765
        %1831 = vmatprep.subr.bf16.mxu0 %v1768
        %1832 = vmatpush1.bf16.msra.mxu0 %v1767
        %1833 = vmatprep.subr.bf16.mxu0 %v1770
        %1834 = vmatpush1.bf16.msra.mxu0 %v1769
        %1835 = vmatprep.subr.bf16.mxu0 %v1772
        %1836 = vmatpush1.bf16.msra.mxu0 %v1771
        %1837 = vmatprep.subr.bf16.mxu0 %v1774
        %1838 = vmatpush1.bf16.msra.mxu0 %v1773
        %1839 = vmatprep.mubr.bf16.mxu0 %v1118
        %1840 = vmatmul.mubr.bf16.gmra.mrb[0].mxu0 %v1117
        %v1841 = vpop.f32.mrb[0].mxu0
        %v1842 = vadd.f32 %v1631, %v1841
        %v1843 = vpop.f32.mrb[0].mxu0
        %v1844 = vadd.f32 %v1632, %v1843
        %v1845 = vpop.f32.mrb[0].mxu0
        %v1846 = vadd.f32 %v1633, %v1845
        %v1847 = vpop.f32.mrb[0].mxu0
        %v1848 = vadd.f32 %v1634, %v1847
        %1849 = vdwg.mxu0
        %v1850 = vadd.f32 %v1842, %v1643
        %v1851 = vadd.f32 %v1844, %v1644
        %v1852 = vadd.f32 %v1846, %v1645
        %v1853 = vadd.f32 %v1848, %v1646
        %v1855 = vlaneseq
        %v1856 = vshrl.u32 %v1855, 7
        %v1857 = vsub.s32 0, %v1856
        %v1858 = vrot.slane %v340, %v1857
        %v1859 = vlaneseq
        %v1860 = vshrl.u32 %v1859, 7
        %v1861 = vsub.s32 1, %v1860
        %v1862 = vrot.slane %v340, %v1861
        %v1865 = vadd.f32 %v1850, %v1858
        %v1866 = vadd.f32 %v1851, %v1862
        %v1867 = vadd.f32 %v1852, %v1858
        %v1868 = vadd.f32 %v1853, %v1862
        %v1869 = vadd.f32 %v1865, %v302
        %v1870 = vadd.f32 %v1866, %v303
        %v1871 = vadd.f32 %v1867, %v304
        %v1872 = vadd.f32 %v1868, %v305
        %1873 = vst [vmem:[%s299] sm:$0xff] %v1869
        %1874 = vst [vmem:[%s299 + $0x8] sm:$0xff] %v1870
        %1875 = vst [vmem:[%s299 + $0x10] sm:$0xff] %v1871
        %1876 = vst [vmem:[%s299 + $0x18] sm:$0xff] %v1872
        %s1877 = sand.u32 %s163, 1
        %s1878 = scalar_lea.sflag [#allocation4], %s1877
        %s1879 = sand.u32 %s163, 1
        %s1880 = smul.addr %s1879, 32
        %s1881 = scalar_lea.vmem [#allocation8], %s1880
        // Predicated region
        $region57: #{tpu_custom_call.1} parent=43 // pred_check
          %p1882 = pneg %p173
        $region58: #{tpu_custom_call.1} parent=43 // pred_check_branch
          %1884 = sbr.rel (%p1882) target = $region60
        $region59: #{tpu_custom_call.1} parent=43 // pred_region
          %s1885 = smul.u32 2, %s24
          %s1887 = ssub.s32 512, 512
          %1888 = vsyncadd %s1878, %s1887
          %s1889 = smul.addr %s1885, 2
          %s1890 = smul.addr %s1889, 128
          %s1891 = scalar_lea.hbm %s6, %s1890
          %s1892 = sshll.u32 %s1881, 4
          %s1893 = int_to_ptr.vmem [resolvable:$true] %s1892
          %1898 = dma.vmem_to_hbm [thread:$0]  %s1893, 512, %s1891, %s1878, 256, 256, 16
        $region60: #{tpu_custom_call.1} parent=43 // pred_fallthru
          _
      $region44: #{tpu_custom_call.1} parent=5 // pred_fallthru
        _
      %p1899 = scmp.le.s32.totalorder 2, %s19
      // Predicated region
      $region61: #{tpu_custom_call.1} parent=5 // pred_check
        %p1900 = pneg %p1899
      $region62: #{tpu_custom_call.1} parent=5 // pred_check_branch
        %1902 = sbr.rel (%p1900) target = $region64
      $region63: #{tpu_custom_call.1} parent=5 // pred_region
        %s1903 = ssub.s32 %s19, 2
        // Predicated region
        $region65: #{tpu_custom_call.1} parent=63 // pred_check
          %p1904 = pneg %p179
        $region66: #{tpu_custom_call.1} parent=63 // pred_check_branch
          %1906 = sbr.rel (%p1904) target = $region68
        $region67: #{tpu_custom_call.1} parent=63 // pred_region
          %s1907 = sand.u32 %s164, 1
          %s1908 = scalar_lea.sflag [#allocation4], %s1907
          %s1909 = sand.u32 %s164, 1
          %s1910 = smul.addr %s1909, 32
          %s1911 = scalar_lea.vmem [#allocation8], %s1910
          %1912 = dma.done %s1908, 512
        $region68: #{tpu_custom_call.1} parent=63 // pred_fallthru
          _
      $region64: #{tpu_custom_call.1} parent=5 // pred_fallthru
        _
    $region6: #{tpu_custom_call.1} parent=1 // loop_footer
      %s23 = sadd.s32 1, %s19
    $region7: #{tpu_custom_call.1} parent=1 // loop_footer_branch
      %18 = sbr.rel target = $region3
    $region8: #{tpu_custom_call.1} parent=1 // loop_exit
      _
    %1913 = vsyncpa [#allocation3], 1
    %s1914 = scalar_lea.sflag [#allocation3], 1
    %1915 = vsyncpa %s1914, 1
    %1916 = vsyncpa [#allocation6], 1
    %1917 = vsyncpa [#allocation4], 1
    %s1918 = scalar_lea.sflag [#allocation4], 1
    %1919 = vsyncpa %s1918, 1

</llo_original>
